<compile_context>
chip_gen: v7x
topology: tpu7x:2x2x1
jax: 0.10.0
libtpu: 0.0.40
codegen_flags: <defaults>
</compile_context>

<pallas_src>
import jax
import jax.numpy as jnp
from jax.experimental import pallas as pl
from jax.experimental.pallas import tpu as pltpu

C_PAD = 128  # lane-dense classifier output width (logical C=7 is sliced out)


def rnn_classify_kernel(x_ref,      # SMEM (Bp, S) int32 tokens (scalar prefetch)
                        table_ref,  # VMEM (V, D)  embedding table (row 0 == 0)
                        wih_ref,    # VMEM (D, H)  input->hidden weight (pre-T)
                        whh_ref,    # VMEM (H, H)  hidden->hidden weight (pre-T)
                        b_ref,      # VMEM (1, H)  b_ih + b_hh
                        wc_ref,     # VMEM (H, C_PAD) classifier weight (padded)
                        bc_ref,     # VMEM (1, C_PAD) classifier bias (padded)
                        out_ref,    # VMEM (Bp, C_PAD) logits slab
                        tw_ref,     # scratch VMEM (V, H)      table @ W_ih + b
                        xw_ref,     # scratch VMEM (S*Bp, H)   per-step x-terms
                        h_ref):     # scratch VMEM (Bp, H)     recurrent state
    Bp, S = x_ref.shape

    # (1) Hoisted input->hidden matmul for the WHOLE vocab in one MXU pass,
    #     with the combined bias folded in:  tw[v] = emb_table[v] @ W_ih + b.
    #     (padding_idx=0: table row 0 is zero, so tw[0] == b, matching PyTorch.)
    tw_ref[...] = (jnp.dot(table_ref[...], wih_ref[...],
                           preferred_element_type=jnp.float32)
                   + b_ref[...])

    # (2) Fused embedding gather (off the serial critical path):
    #     xw[t*Bp + b] = tw[token[b, t]]  -- dynamic-row VMEM loads driven by
    #     SMEM scalars; trip count S*Bp is tiny and fully static.
    for t in range(S):
        for bi in range(Bp):
            tok = x_ref[bi, t]
            xw_ref[pl.ds(t * Bp + bi, 1), :] = tw_ref[pl.ds(tok, 1), :]

    # (3) Serial recurrence: only h @ W_hh and tanh remain on the critical path.
    h_ref[...] = jnp.zeros_like(h_ref)        # h_0 = 0 (PyTorch default)
    whh = whh_ref[...]                        # hoisted loop-invariant load
    for t in range(S):
        x_term = xw_ref[pl.ds(t * Bp, Bp), :]
        h_ref[...] = jnp.tanh(
            x_term + jnp.dot(h_ref[...], whh,
                             preferred_element_type=jnp.float32))

    # (4) classify(rnn_out[:, -1, :]) into a lane-dense (Bp, 128) slab.
    out_ref[...] = (jnp.dot(h_ref[...], wc_ref[...],
                            preferred_element_type=jnp.float32)
                    + bc_ref[...])


def torch_model_forward(x_tokens, params):
    """Wrapper: pad batch to a sublane multiple, run the fused kernel, slice."""
    B, S = x_tokens.shape
    table = params["emb_table"]
    V, D = table.shape
    H = params["w_hh"].shape[0]
    C = params["b_c"].shape[-1]          # logical number of classes
    Cp = params["w_c_pad"].shape[-1]     # lane-dense padded width

    Bp = max(8, ((B + 7) // 8) * 8)      # sublane-friendly batch
    x_pad = x_tokens.astype(jnp.int32)
    if Bp != B:
        x_pad = jnp.pad(x_pad, ((0, Bp - B), (0, 0)))  # token 0 = padding row

    grid_spec = pltpu.PrefetchScalarGridSpec(
        num_scalar_prefetch=1,            # tokens -> SMEM
        grid=(1,),
        in_specs=[
            pl.BlockSpec((V, D), lambda i, x: (0, 0)),
            pl.BlockSpec((D, H), lambda i, x: (0, 0)),
            pl.BlockSpec((H, H), lambda i, x: (0, 0)),
            pl.BlockSpec((1, H), lambda i, x: (0, 0)),
            pl.BlockSpec((H, Cp), lambda i, x: (0, 0)),
            pl.BlockSpec((1, Cp), lambda i, x: (0, 0)),
        ],
        out_specs=pl.BlockSpec((Bp, Cp), lambda i, x: (0, 0)),
        scratch_shapes=[
            pltpu.VMEM((V, H), jnp.float32),        # tw = table @ W_ih + b
            pltpu.VMEM((S * Bp, H), jnp.float32),   # per-timestep x-terms
            pltpu.VMEM((Bp, H), jnp.float32),       # recurrent hidden state
        ],
    )

    out = pl.pallas_call(
        rnn_classify_kernel,
        out_shape=jax.ShapeDtypeStruct((Bp, Cp), jnp.float32),
        grid_spec=grid_spec,
        compiler_params=pltpu.CompilerParams(
            dimension_semantics=("arbitrary",)),
    )(x_pad, table, params["w_ih"], params["w_hh"], params["b"],
      params["w_c_pad"], params["b_c_pad"])

    return out[:B, :C]


def init_params(key, vocab_size, vector_dim, hidden_dim, sentence_length,
                num_classes_pad=C_PAD):
    """Deterministic synthetic parameters matching the PyTorch module shapes."""
    k_emb, k_ih, k_hh, k_bih, k_bhh, k_wc, k_bc = jax.random.split(key, 7)
    num_classes = sentence_length + 1

    emb_table = jax.random.normal(k_emb, (vocab_size, vector_dim),
                                  jnp.float32) * 0.1
    emb_table = emb_table.at[0].set(0.0)        # padding_idx=0 -> zero row

    # PyTorch nn.RNN stores W_ih:(H,D), W_hh:(H,H); pre-transposed to (in,out).
    w_ih = jax.random.normal(k_ih, (vector_dim, hidden_dim), jnp.float32) * 0.1
    w_hh = jax.random.normal(k_hh, (hidden_dim, hidden_dim), jnp.float32) * 0.1
    b_ih = jax.random.normal(k_bih, (hidden_dim,), jnp.float32) * 0.1
    b_hh = jax.random.normal(k_bhh, (hidden_dim,), jnp.float32) * 0.1
    b = (b_ih + b_hh).reshape(1, hidden_dim)

    # PyTorch nn.Linear stores W:(C,H); pre-transposed to (H,C).
    w_c = jax.random.normal(k_wc, (hidden_dim, num_classes), jnp.float32) * 0.1
    b_c = (jax.random.normal(k_bc, (num_classes,), jnp.float32) * 0.1
           ).reshape(1, num_classes)

    # Lane-dense padded classifier weights (extra columns are zero -> sliced).
    w_c_pad = jnp.zeros((hidden_dim, num_classes_pad),
                        jnp.float32).at[:, :num_classes].set(w_c)
    b_c_pad = jnp.zeros((1, num_classes_pad),
                        jnp.float32).at[:, :num_classes].set(b_c)

    return dict(emb_table=emb_table, w_ih=w_ih, w_hh=w_hh, b=b,
                w_c=w_c, b_c=b_c, w_c_pad=w_c_pad, b_c_pad=b_c_pad)


def reference_forward(x_tokens, params):
    """Pure-JAX reference of the PyTorch forward (for sanity checking)."""
    emb = params["emb_table"][x_tokens]            # (B, S, D)
    B = x_tokens.shape[0]
    H = params["w_hh"].shape[0]
    h = jnp.zeros((B, H), jnp.float32)
    for t in range(x_tokens.shape[1]):
        h = jnp.tanh(emb[:, t, :] @ params["w_ih"]
                     + h @ params["w_hh"] + params["b"])
    return h @ params["w_c"] + params["b_c"]


if __name__ == "__main__":
    # Small shapes consistent with the module's forward.
    VOCAB_SIZE = 20
    VECTOR_DIM = 16      # embedding dim
    HIDDEN_DIM = 64      # rnn hidden dim (module default 50 is a bad TPU shape;
                         #                 64 keeps lanes/MXU friendly)
    SENT_LEN = 6         # sentence_length -> num_classes = 7
    BATCH = 8            # sublane-friendly batch

    key = jax.random.PRNGKey(0)
    k_params, k_x = jax.random.split(key)

    params = init_params(k_params, VOCAB_SIZE, VECTOR_DIM, HIDDEN_DIM, SENT_LEN)
    x = jax.random.randint(k_x, (BATCH, SENT_LEN), 0, VOCAB_SIZE, jnp.int32)

    fwd = jax.jit(torch_model_forward)
    logits = jax.block_until_ready(fwd(x, params))
    ref = jax.block_until_ready(reference_forward(x, params))

    assert logits.shape == (BATCH, SENT_LEN + 1)
    assert jnp.allclose(logits, ref, atol=1e-4, rtol=1e-4), (
        float(jnp.max(jnp.abs(logits - ref))))

    # TODO(synk): training path (CrossEntropyLoss with ignore_index) is not
    # part of the inference hot path and is left to the host/JAX side.
    print("KERNEL_OK")
</pallas_src>

<mosaic_0001>
module attributes {stable_mosaic.version = 11 : i64} {
  func.func @rnn_classify_kernel(%arg0: i32, %arg1: memref<8x6xi32, #tpu.memory_space<smem>>, %arg2: memref<20x16xf32, #tpu.memory_space<vmem>>, %arg3: memref<16x64xf32, #tpu.memory_space<vmem>>, %arg4: memref<64x64xf32, #tpu.memory_space<vmem>>, %arg5: memref<1x64xf32, #tpu.memory_space<vmem>>, %arg6: memref<64x128xf32, #tpu.memory_space<vmem>>, %arg7: memref<1x128xf32, #tpu.memory_space<vmem>>, %arg8: memref<8x128xf32, #tpu.memory_space<vmem>>, %arg9: memref<20x64xf32, #tpu.memory_space<vmem>>, %arg10: memref<48x64xf32, #tpu.memory_space<vmem>>, %arg11: memref<8x64xf32, #tpu.memory_space<vmem>>) attributes {dimension_semantics = [#tpu.dimension_semantics<arbitrary>], iteration_bounds = array<i64: 1>, scalar_prefetch = 1 : i64, scratch_operands = 3 : i64, tpu.core_type = #tpu.core_type<tc>, window_params = [{pipeline_mode = #tpu.pipeline_mode<synchronous>, transform_indices = @transform_0, window_bounds = array<i64: 20, 16>}, {pipeline_mode = #tpu.pipeline_mode<synchronous>, transform_indices = @transform_1, window_bounds = array<i64: 16, 64>}, {pipeline_mode = #tpu.pipeline_mode<synchronous>, transform_indices = @transform_2, window_bounds = array<i64: 64, 64>}, {pipeline_mode = #tpu.pipeline_mode<synchronous>, transform_indices = @transform_3, window_bounds = array<i64: 1, 64>}, {pipeline_mode = #tpu.pipeline_mode<synchronous>, transform_indices = @transform_4, window_bounds = array<i64: 64, 128>}, {pipeline_mode = #tpu.pipeline_mode<synchronous>, transform_indices = @transform_5, window_bounds = array<i64: 1, 128>}, {pipeline_mode = #tpu.pipeline_mode<synchronous>, transform_indices = @transform_6, window_bounds = array<i64: 8, 128>}]} {
    %c0 = arith.constant 0 : index
    %c0_0 = arith.constant 0 : index
    %0 = vector.load %arg2[%c0, %c0_0] : memref<20x16xf32, #tpu.memory_space<vmem>>, vector<20x16xf32>
    %c0_1 = arith.constant 0 : index
    %c0_2 = arith.constant 0 : index
    %1 = vector.load %arg3[%c0_1, %c0_2] : memref<16x64xf32, #tpu.memory_space<vmem>>, vector<16x64xf32>
    %cst = arith.constant dense<0.000000e+00> : vector<20x64xf32>
    %2 = tpu.matmul %0, %1, %cst {dimension_numbers = #tpu.dot_dimension_numbers<[1], [0], [0], [1], [0, 0, 1, 1], [], []>} : vector<20x16xf32>, vector<16x64xf32>, vector<20x64xf32> -> vector<20x64xf32>
    %c0_3 = arith.constant 0 : index
    %c0_4 = arith.constant 0 : index
    %3 = vector.load %arg5[%c0_3, %c0_4] : memref<1x64xf32, #tpu.memory_space<vmem>>, vector<1x64xf32>
    %4 = vector.broadcast %3 : vector<1x64xf32> to vector<20x64xf32>
    %5 = arith.addf %2, %4 : vector<20x64xf32>
    %c0_5 = arith.constant 0 : index
    %c0_6 = arith.constant 0 : index
    %6 = vector.load %arg9[%c0_5, %c0_6] : memref<20x64xf32, #tpu.memory_space<vmem>>, vector<20x64xf32>
    tpu.vector_store %arg9[%c0_5, %c0_6], %5 {strides = array<i32>} : memref<20x64xf32, #tpu.memory_space<vmem>>, vector<20x64xf32>,
    %c0_7 = arith.constant 0 : index
    %c0_8 = arith.constant 0 : index
    %7 = memref.load %arg1[%c0_7, %c0_8] : memref<8x6xi32, #tpu.memory_space<smem>>
    %8 = arith.index_cast %7 : i32 to index
    %c0_9 = arith.constant 0 : index
    %9 = vector.load %arg9[%8, %c0_9] : memref<20x64xf32, #tpu.memory_space<vmem>>, vector<1x64xf32>
    %c0_10 = arith.constant 0 : index
    %c0_11 = arith.constant 0 : index
    %10 = vector.load %arg10[%c0_10, %c0_11] : memref<48x64xf32, #tpu.memory_space<vmem>>, vector<1x64xf32>
    tpu.vector_store %arg10[%c0_10, %c0_11], %9 {strides = array<i32>} : memref<48x64xf32, #tpu.memory_space<vmem>>, vector<1x64xf32>,
    %c1 = arith.constant 1 : index
    %c0_12 = arith.constant 0 : index
    %11 = memref.load %arg1[%c1, %c0_12] : memref<8x6xi32, #tpu.memory_space<smem>>
    %12 = arith.index_cast %11 : i32 to index
    %c0_13 = arith.constant 0 : index
    %13 = vector.load %arg9[%12, %c0_13] : memref<20x64xf32, #tpu.memory_space<vmem>>, vector<1x64xf32>
    %c1_14 = arith.constant 1 : index
    %c0_15 = arith.constant 0 : index
    %14 = vector.load %arg10[%c1_14, %c0_15] : memref<48x64xf32, #tpu.memory_space<vmem>>, vector<1x64xf32>
    tpu.vector_store %arg10[%c1_14, %c0_15], %13 {strides = array<i32>} : memref<48x64xf32, #tpu.memory_space<vmem>>, vector<1x64xf32>,
    %c2 = arith.constant 2 : index
    %c0_16 = arith.constant 0 : index
    %15 = memref.load %arg1[%c2, %c0_16] : memref<8x6xi32, #tpu.memory_space<smem>>
    %16 = arith.index_cast %15 : i32 to index
    %c0_17 = arith.constant 0 : index
    %17 = vector.load %arg9[%16, %c0_17] : memref<20x64xf32, #tpu.memory_space<vmem>>, vector<1x64xf32>
    %c2_18 = arith.constant 2 : index
    %c0_19 = arith.constant 0 : index
    %18 = vector.load %arg10[%c2_18, %c0_19] : memref<48x64xf32, #tpu.memory_space<vmem>>, vector<1x64xf32>
    tpu.vector_store %arg10[%c2_18, %c0_19], %17 {strides = array<i32>} : memref<48x64xf32, #tpu.memory_space<vmem>>, vector<1x64xf32>,
    %c3 = arith.constant 3 : index
    %c0_20 = arith.constant 0 : index
    %19 = memref.load %arg1[%c3, %c0_20] : memref<8x6xi32, #tpu.memory_space<smem>>
    %20 = arith.index_cast %19 : i32 to index
    %c0_21 = arith.constant 0 : index
    %21 = vector.load %arg9[%20, %c0_21] : memref<20x64xf32, #tpu.memory_space<vmem>>, vector<1x64xf32>
    %c3_22 = arith.constant 3 : index
    %c0_23 = arith.constant 0 : index
    %22 = vector.load %arg10[%c3_22, %c0_23] : memref<48x64xf32, #tpu.memory_space<vmem>>, vector<1x64xf32>
    tpu.vector_store %arg10[%c3_22, %c0_23], %21 {strides = array<i32>} : memref<48x64xf32, #tpu.memory_space<vmem>>, vector<1x64xf32>,
    %c4 = arith.constant 4 : index
    %c0_24 = arith.constant 0 : index
    %23 = memref.load %arg1[%c4, %c0_24] : memref<8x6xi32, #tpu.memory_space<smem>>
    %24 = arith.index_cast %23 : i32 to index
    %c0_25 = arith.constant 0 : index
    %25 = vector.load %arg9[%24, %c0_25] : memref<20x64xf32, #tpu.memory_space<vmem>>, vector<1x64xf32>
    %c4_26 = arith.constant 4 : index
    %c0_27 = arith.constant 0 : index
    %26 = vector.load %arg10[%c4_26, %c0_27] : memref<48x64xf32, #tpu.memory_space<vmem>>, vector<1x64xf32>
    tpu.vector_store %arg10[%c4_26, %c0_27], %25 {strides = array<i32>} : memref<48x64xf32, #tpu.memory_space<vmem>>, vector<1x64xf32>,
    %c5 = arith.constant 5 : index
    %c0_28 = arith.constant 0 : index
    %27 = memref.load %arg1[%c5, %c0_28] : memref<8x6xi32, #tpu.memory_space<smem>>
    %28 = arith.index_cast %27 : i32 to index
    %c0_29 = arith.constant 0 : index
    %29 = vector.load %arg9[%28, %c0_29] : memref<20x64xf32, #tpu.memory_space<vmem>>, vector<1x64xf32>
    %c5_30 = arith.constant 5 : index
    %c0_31 = arith.constant 0 : index
    %30 = vector.load %arg10[%c5_30, %c0_31] : memref<48x64xf32, #tpu.memory_space<vmem>>, vector<1x64xf32>
    tpu.vector_store %arg10[%c5_30, %c0_31], %29 {strides = array<i32>} : memref<48x64xf32, #tpu.memory_space<vmem>>, vector<1x64xf32>,
    %c6 = arith.constant 6 : index
    %c0_32 = arith.constant 0 : index
    %31 = memref.load %arg1[%c6, %c0_32] : memref<8x6xi32, #tpu.memory_space<smem>>
    %32 = arith.index_cast %31 : i32 to index
    %c0_33 = arith.constant 0 : index
    %33 = vector.load %arg9[%32, %c0_33] : memref<20x64xf32, #tpu.memory_space<vmem>>, vector<1x64xf32>
    %c6_34 = arith.constant 6 : index
    %c0_35 = arith.constant 0 : index
    %34 = vector.load %arg10[%c6_34, %c0_35] : memref<48x64xf32, #tpu.memory_space<vmem>>, vector<1x64xf32>
    tpu.vector_store %arg10[%c6_34, %c0_35], %33 {strides = array<i32>} : memref<48x64xf32, #tpu.memory_space<vmem>>, vector<1x64xf32>,
    %c7 = arith.constant 7 : index
    %c0_36 = arith.constant 0 : index
    %35 = memref.load %arg1[%c7, %c0_36] : memref<8x6xi32, #tpu.memory_space<smem>>
    %36 = arith.index_cast %35 : i32 to index
    %c0_37 = arith.constant 0 : index
    %37 = vector.load %arg9[%36, %c0_37] : memref<20x64xf32, #tpu.memory_space<vmem>>, vector<1x64xf32>
    %c7_38 = arith.constant 7 : index
    %c0_39 = arith.constant 0 : index
    %38 = vector.load %arg10[%c7_38, %c0_39] : memref<48x64xf32, #tpu.memory_space<vmem>>, vector<1x64xf32>
    tpu.vector_store %arg10[%c7_38, %c0_39], %37 {strides = array<i32>} : memref<48x64xf32, #tpu.memory_space<vmem>>, vector<1x64xf32>,
    %c0_40 = arith.constant 0 : index
    %c1_41 = arith.constant 1 : index
    %39 = memref.load %arg1[%c0_40, %c1_41] : memref<8x6xi32, #tpu.memory_space<smem>>
    %40 = arith.index_cast %39 : i32 to index
    %c0_42 = arith.constant 0 : index
    %41 = vector.load %arg9[%40, %c0_42] : memref<20x64xf32, #tpu.memory_space<vmem>>, vector<1x64xf32>
    %c8 = arith.constant 8 : index
    %c0_43 = arith.constant 0 : index
    %42 = vector.load %arg10[%c8, %c0_43] : memref<48x64xf32, #tpu.memory_space<vmem>>, vector<1x64xf32>
    tpu.vector_store %arg10[%c8, %c0_43], %41 {strides = array<i32>} : memref<48x64xf32, #tpu.memory_space<vmem>>, vector<1x64xf32>,
    %c1_44 = arith.constant 1 : index
    %c1_45 = arith.constant 1 : index
    %43 = memref.load %arg1[%c1_44, %c1_45] : memref<8x6xi32, #tpu.memory_space<smem>>
    %44 = arith.index_cast %43 : i32 to index
    %c0_46 = arith.constant 0 : index
    %45 = vector.load %arg9[%44, %c0_46] : memref<20x64xf32, #tpu.memory_space<vmem>>, vector<1x64xf32>
    %c9 = arith.constant 9 : index
    %c0_47 = arith.constant 0 : index
    %46 = vector.load %arg10[%c9, %c0_47] : memref<48x64xf32, #tpu.memory_space<vmem>>, vector<1x64xf32>
    tpu.vector_store %arg10[%c9, %c0_47], %45 {strides = array<i32>} : memref<48x64xf32, #tpu.memory_space<vmem>>, vector<1x64xf32>,
    %c2_48 = arith.constant 2 : index
    %c1_49 = arith.constant 1 : index
    %47 = memref.load %arg1[%c2_48, %c1_49] : memref<8x6xi32, #tpu.memory_space<smem>>
    %48 = arith.index_cast %47 : i32 to index
    %c0_50 = arith.constant 0 : index
    %49 = vector.load %arg9[%48, %c0_50] : memref<20x64xf32, #tpu.memory_space<vmem>>, vector<1x64xf32>
    %c10 = arith.constant 10 : index
    %c0_51 = arith.constant 0 : index
    %50 = vector.load %arg10[%c10, %c0_51] : memref<48x64xf32, #tpu.memory_space<vmem>>, vector<1x64xf32>
    tpu.vector_store %arg10[%c10, %c0_51], %49 {strides = array<i32>} : memref<48x64xf32, #tpu.memory_space<vmem>>, vector<1x64xf32>,
    %c3_52 = arith.constant 3 : index
    %c1_53 = arith.constant 1 : index
    %51 = memref.load %arg1[%c3_52, %c1_53] : memref<8x6xi32, #tpu.memory_space<smem>>
    %52 = arith.index_cast %51 : i32 to index
    %c0_54 = arith.constant 0 : index
    %53 = vector.load %arg9[%52, %c0_54] : memref<20x64xf32, #tpu.memory_space<vmem>>, vector<1x64xf32>
    %c11 = arith.constant 11 : index
    %c0_55 = arith.constant 0 : index
    %54 = vector.load %arg10[%c11, %c0_55] : memref<48x64xf32, #tpu.memory_space<vmem>>, vector<1x64xf32>
    tpu.vector_store %arg10[%c11, %c0_55], %53 {strides = array<i32>} : memref<48x64xf32, #tpu.memory_space<vmem>>, vector<1x64xf32>,
    %c4_56 = arith.constant 4 : index
    %c1_57 = arith.constant 1 : index
    %55 = memref.load %arg1[%c4_56, %c1_57] : memref<8x6xi32, #tpu.memory_space<smem>>
    %56 = arith.index_cast %55 : i32 to index
    %c0_58 = arith.constant 0 : index
    %57 = vector.load %arg9[%56, %c0_58] : memref<20x64xf32, #tpu.memory_space<vmem>>, vector<1x64xf32>
    %c12 = arith.constant 12 : index
    %c0_59 = arith.constant 0 : index
    %58 = vector.load %arg10[%c12, %c0_59] : memref<48x64xf32, #tpu.memory_space<vmem>>, vector<1x64xf32>
    tpu.vector_store %arg10[%c12, %c0_59], %57 {strides = array<i32>} : memref<48x64xf32, #tpu.memory_space<vmem>>, vector<1x64xf32>,
    %c5_60 = arith.constant 5 : index
    %c1_61 = arith.constant 1 : index
    %59 = memref.load %arg1[%c5_60, %c1_61] : memref<8x6xi32, #tpu.memory_space<smem>>
    %60 = arith.index_cast %59 : i32 to index
    %c0_62 = arith.constant 0 : index
    %61 = vector.load %arg9[%60, %c0_62] : memref<20x64xf32, #tpu.memory_space<vmem>>, vector<1x64xf32>
    %c13 = arith.constant 13 : index
    %c0_63 = arith.constant 0 : index
    %62 = vector.load %arg10[%c13, %c0_63] : memref<48x64xf32, #tpu.memory_space<vmem>>, vector<1x64xf32>
    tpu.vector_store %arg10[%c13, %c0_63], %61 {strides = array<i32>} : memref<48x64xf32, #tpu.memory_space<vmem>>, vector<1x64xf32>,
    %c6_64 = arith.constant 6 : index
    %c1_65 = arith.constant 1 : index
    %63 = memref.load %arg1[%c6_64, %c1_65] : memref<8x6xi32, #tpu.memory_space<smem>>
    %64 = arith.index_cast %63 : i32 to index
    %c0_66 = arith.constant 0 : index
    %65 = vector.load %arg9[%64, %c0_66] : memref<20x64xf32, #tpu.memory_space<vmem>>, vector<1x64xf32>
    %c14 = arith.constant 14 : index
    %c0_67 = arith.constant 0 : index
    %66 = vector.load %arg10[%c14, %c0_67] : memref<48x64xf32, #tpu.memory_space<vmem>>, vector<1x64xf32>
    tpu.vector_store %arg10[%c14, %c0_67], %65 {strides = array<i32>} : memref<48x64xf32, #tpu.memory_space<vmem>>, vector<1x64xf32>,
    %c7_68 = arith.constant 7 : index
    %c1_69 = arith.constant 1 : index
    %67 = memref.load %arg1[%c7_68, %c1_69] : memref<8x6xi32, #tpu.memory_space<smem>>
    %68 = arith.index_cast %67 : i32 to index
    %c0_70 = arith.constant 0 : index
    %69 = vector.load %arg9[%68, %c0_70] : memref<20x64xf32, #tpu.memory_space<vmem>>, vector<1x64xf32>
    %c15 = arith.constant 15 : index
    %c0_71 = arith.constant 0 : index
    %70 = vector.load %arg10[%c15, %c0_71] : memref<48x64xf32, #tpu.memory_space<vmem>>, vector<1x64xf32>
    tpu.vector_store %arg10[%c15, %c0_71], %69 {strides = array<i32>} : memref<48x64xf32, #tpu.memory_space<vmem>>, vector<1x64xf32>,
    %c0_72 = arith.constant 0 : index
    %c2_73 = arith.constant 2 : index
    %71 = memref.load %arg1[%c0_72, %c2_73] : memref<8x6xi32, #tpu.memory_space<smem>>
    %72 = arith.index_cast %71 : i32 to index
    %c0_74 = arith.constant 0 : index
    %73 = vector.load %arg9[%72, %c0_74] : memref<20x64xf32, #tpu.memory_space<vmem>>, vector<1x64xf32>
    %c16 = arith.constant 16 : index
    %c0_75 = arith.constant 0 : index
    %74 = vector.load %arg10[%c16, %c0_75] : memref<48x64xf32, #tpu.memory_space<vmem>>, vector<1x64xf32>
    tpu.vector_store %arg10[%c16, %c0_75], %73 {strides = array<i32>} : memref<48x64xf32, #tpu.memory_space<vmem>>, vector<1x64xf32>,
    %c1_76 = arith.constant 1 : index
    %c2_77 = arith.constant 2 : index
    %75 = memref.load %arg1[%c1_76, %c2_77] : memref<8x6xi32, #tpu.memory_space<smem>>
    %76 = arith.index_cast %75 : i32 to index
    %c0_78 = arith.constant 0 : index
    %77 = vector.load %arg9[%76, %c0_78] : memref<20x64xf32, #tpu.memory_space<vmem>>, vector<1x64xf32>
    %c17 = arith.constant 17 : index
    %c0_79 = arith.constant 0 : index
    %78 = vector.load %arg10[%c17, %c0_79] : memref<48x64xf32, #tpu.memory_space<vmem>>, vector<1x64xf32>
    tpu.vector_store %arg10[%c17, %c0_79], %77 {strides = array<i32>} : memref<48x64xf32, #tpu.memory_space<vmem>>, vector<1x64xf32>,
    %c2_80 = arith.constant 2 : index
    %c2_81 = arith.constant 2 : index
    %79 = memref.load %arg1[%c2_80, %c2_81] : memref<8x6xi32, #tpu.memory_space<smem>>
    %80 = arith.index_cast %79 : i32 to index
    %c0_82 = arith.constant 0 : index
    %81 = vector.load %arg9[%80, %c0_82] : memref<20x64xf32, #tpu.memory_space<vmem>>, vector<1x64xf32>
    %c18 = arith.constant 18 : index
    %c0_83 = arith.constant 0 : index
    %82 = vector.load %arg10[%c18, %c0_83] : memref<48x64xf32, #tpu.memory_space<vmem>>, vector<1x64xf32>
    tpu.vector_store %arg10[%c18, %c0_83], %81 {strides = array<i32>} : memref<48x64xf32, #tpu.memory_space<vmem>>, vector<1x64xf32>,
    %c3_84 = arith.constant 3 : index
    %c2_85 = arith.constant 2 : index
    %83 = memref.load %arg1[%c3_84, %c2_85] : memref<8x6xi32, #tpu.memory_space<smem>>
    %84 = arith.index_cast %83 : i32 to index
    %c0_86 = arith.constant 0 : index
    %85 = vector.load %arg9[%84, %c0_86] : memref<20x64xf32, #tpu.memory_space<vmem>>, vector<1x64xf32>
    %c19 = arith.constant 19 : index
    %c0_87 = arith.constant 0 : index
    %86 = vector.load %arg10[%c19, %c0_87] : memref<48x64xf32, #tpu.memory_space<vmem>>, vector<1x64xf32>
    tpu.vector_store %arg10[%c19, %c0_87], %85 {strides = array<i32>} : memref<48x64xf32, #tpu.memory_space<vmem>>, vector<1x64xf32>,
    %c4_88 = arith.constant 4 : index
    %c2_89 = arith.constant 2 : index
    %87 = memref.load %arg1[%c4_88, %c2_89] : memref<8x6xi32, #tpu.memory_space<smem>>
    %88 = arith.index_cast %87 : i32 to index
    %c0_90 = arith.constant 0 : index
    %89 = vector.load %arg9[%88, %c0_90] : memref<20x64xf32, #tpu.memory_space<vmem>>, vector<1x64xf32>
    %c20 = arith.constant 20 : index
    %c0_91 = arith.constant 0 : index
    %90 = vector.load %arg10[%c20, %c0_91] : memref<48x64xf32, #tpu.memory_space<vmem>>, vector<1x64xf32>
    tpu.vector_store %arg10[%c20, %c0_91], %89 {strides = array<i32>} : memref<48x64xf32, #tpu.memory_space<vmem>>, vector<1x64xf32>,
    %c5_92 = arith.constant 5 : index
    %c2_93 = arith.constant 2 : index
    %91 = memref.load %arg1[%c5_92, %c2_93] : memref<8x6xi32, #tpu.memory_space<smem>>
    %92 = arith.index_cast %91 : i32 to index
    %c0_94 = arith.constant 0 : index
    %93 = vector.load %arg9[%92, %c0_94] : memref<20x64xf32, #tpu.memory_space<vmem>>, vector<1x64xf32>
    %c21 = arith.constant 21 : index
    %c0_95 = arith.constant 0 : index
    %94 = vector.load %arg10[%c21, %c0_95] : memref<48x64xf32, #tpu.memory_space<vmem>>, vector<1x64xf32>
    tpu.vector_store %arg10[%c21, %c0_95], %93 {strides = array<i32>} : memref<48x64xf32, #tpu.memory_space<vmem>>, vector<1x64xf32>,
    %c6_96 = arith.constant 6 : index
    %c2_97 = arith.constant 2 : index
    %95 = memref.load %arg1[%c6_96, %c2_97] : memref<8x6xi32, #tpu.memory_space<smem>>
    %96 = arith.index_cast %95 : i32 to index
    %c0_98 = arith.constant 0 : index
    %97 = vector.load %arg9[%96, %c0_98] : memref<20x64xf32, #tpu.memory_space<vmem>>, vector<1x64xf32>
    %c22 = arith.constant 22 : index
    %c0_99 = arith.constant 0 : index
    %98 = vector.load %arg10[%c22, %c0_99] : memref<48x64xf32, #tpu.memory_space<vmem>>, vector<1x64xf32>
    tpu.vector_store %arg10[%c22, %c0_99], %97 {strides = array<i32>} : memref<48x64xf32, #tpu.memory_space<vmem>>, vector<1x64xf32>,
    %c7_100 = arith.constant 7 : index
    %c2_101 = arith.constant 2 : index
    %99 = memref.load %arg1[%c7_100, %c2_101] : memref<8x6xi32, #tpu.memory_space<smem>>
    %100 = arith.index_cast %99 : i32 to index
    %c0_102 = arith.constant 0 : index
    %101 = vector.load %arg9[%100, %c0_102] : memref<20x64xf32, #tpu.memory_space<vmem>>, vector<1x64xf32>
    %c23 = arith.constant 23 : index
    %c0_103 = arith.constant 0 : index
    %102 = vector.load %arg10[%c23, %c0_103] : memref<48x64xf32, #tpu.memory_space<vmem>>, vector<1x64xf32>
    tpu.vector_store %arg10[%c23, %c0_103], %101 {strides = array<i32>} : memref<48x64xf32, #tpu.memory_space<vmem>>, vector<1x64xf32>,
    %c0_104 = arith.constant 0 : index
    %c3_105 = arith.constant 3 : index
    %103 = memref.load %arg1[%c0_104, %c3_105] : memref<8x6xi32, #tpu.memory_space<smem>>
    %104 = arith.index_cast %103 : i32 to index
    %c0_106 = arith.constant 0 : index
    %105 = vector.load %arg9[%104, %c0_106] : memref<20x64xf32, #tpu.memory_space<vmem>>, vector<1x64xf32>
    %c24 = arith.constant 24 : index
    %c0_107 = arith.constant 0 : index
    %106 = vector.load %arg10[%c24, %c0_107] : memref<48x64xf32, #tpu.memory_space<vmem>>, vector<1x64xf32>
    tpu.vector_store %arg10[%c24, %c0_107], %105 {strides = array<i32>} : memref<48x64xf32, #tpu.memory_space<vmem>>, vector<1x64xf32>,
    %c1_108 = arith.constant 1 : index
    %c3_109 = arith.constant 3 : index
    %107 = memref.load %arg1[%c1_108, %c3_109] : memref<8x6xi32, #tpu.memory_space<smem>>
    %108 = arith.index_cast %107 : i32 to index
    %c0_110 = arith.constant 0 : index
    %109 = vector.load %arg9[%108, %c0_110] : memref<20x64xf32, #tpu.memory_space<vmem>>, vector<1x64xf32>
    %c25 = arith.constant 25 : index
    %c0_111 = arith.constant 0 : index
    %110 = vector.load %arg10[%c25, %c0_111] : memref<48x64xf32, #tpu.memory_space<vmem>>, vector<1x64xf32>
    tpu.vector_store %arg10[%c25, %c0_111], %109 {strides = array<i32>} : memref<48x64xf32, #tpu.memory_space<vmem>>, vector<1x64xf32>,
    %c2_112 = arith.constant 2 : index
    %c3_113 = arith.constant 3 : index
    %111 = memref.load %arg1[%c2_112, %c3_113] : memref<8x6xi32, #tpu.memory_space<smem>>
    %112 = arith.index_cast %111 : i32 to index
    %c0_114 = arith.constant 0 : index
    %113 = vector.load %arg9[%112, %c0_114] : memref<20x64xf32, #tpu.memory_space<vmem>>, vector<1x64xf32>
    %c26 = arith.constant 26 : index
    %c0_115 = arith.constant 0 : index
    %114 = vector.load %arg10[%c26, %c0_115] : memref<48x64xf32, #tpu.memory_space<vmem>>, vector<1x64xf32>
    tpu.vector_store %arg10[%c26, %c0_115], %113 {strides = array<i32>} : memref<48x64xf32, #tpu.memory_space<vmem>>, vector<1x64xf32>,
    %c3_116 = arith.constant 3 : index
    %c3_117 = arith.constant 3 : index
    %115 = memref.load %arg1[%c3_116, %c3_117] : memref<8x6xi32, #tpu.memory_space<smem>>
    %116 = arith.index_cast %115 : i32 to index
    %c0_118 = arith.constant 0 : index
    %117 = vector.load %arg9[%116, %c0_118] : memref<20x64xf32, #tpu.memory_space<vmem>>, vector<1x64xf32>
    %c27 = arith.constant 27 : index
    %c0_119 = arith.constant 0 : index
    %118 = vector.load %arg10[%c27, %c0_119] : memref<48x64xf32, #tpu.memory_space<vmem>>, vector<1x64xf32>
    tpu.vector_store %arg10[%c27, %c0_119], %117 {strides = array<i32>} : memref<48x64xf32, #tpu.memory_space<vmem>>, vector<1x64xf32>,
    %c4_120 = arith.constant 4 : index
    %c3_121 = arith.constant 3 : index
    %119 = memref.load %arg1[%c4_120, %c3_121] : memref<8x6xi32, #tpu.memory_space<smem>>
    %120 = arith.index_cast %119 : i32 to index
    %c0_122 = arith.constant 0 : index
    %121 = vector.load %arg9[%120, %c0_122] : memref<20x64xf32, #tpu.memory_space<vmem>>, vector<1x64xf32>
    %c28 = arith.constant 28 : index
    %c0_123 = arith.constant 0 : index
    %122 = vector.load %arg10[%c28, %c0_123] : memref<48x64xf32, #tpu.memory_space<vmem>>, vector<1x64xf32>
    tpu.vector_store %arg10[%c28, %c0_123], %121 {strides = array<i32>} : memref<48x64xf32, #tpu.memory_space<vmem>>, vector<1x64xf32>,
    %c5_124 = arith.constant 5 : index
    %c3_125 = arith.constant 3 : index
    %123 = memref.load %arg1[%c5_124, %c3_125] : memref<8x6xi32, #tpu.memory_space<smem>>
    %124 = arith.index_cast %123 : i32 to index
    %c0_126 = arith.constant 0 : index
    %125 = vector.load %arg9[%124, %c0_126] : memref<20x64xf32, #tpu.memory_space<vmem>>, vector<1x64xf32>
    %c29 = arith.constant 29 : index
    %c0_127 = arith.constant 0 : index
    %126 = vector.load %arg10[%c29, %c0_127] : memref<48x64xf32, #tpu.memory_space<vmem>>, vector<1x64xf32>
    tpu.vector_store %arg10[%c29, %c0_127], %125 {strides = array<i32>} : memref<48x64xf32, #tpu.memory_space<vmem>>, vector<1x64xf32>,
    %c6_128 = arith.constant 6 : index
    %c3_129 = arith.constant 3 : index
    %127 = memref.load %arg1[%c6_128, %c3_129] : memref<8x6xi32, #tpu.memory_space<smem>>
    %128 = arith.index_cast %127 : i32 to index
    %c0_130 = arith.constant 0 : index
    %129 = vector.load %arg9[%128, %c0_130] : memref<20x64xf32, #tpu.memory_space<vmem>>, vector<1x64xf32>
    %c30 = arith.constant 30 : index
    %c0_131 = arith.constant 0 : index
    %130 = vector.load %arg10[%c30, %c0_131] : memref<48x64xf32, #tpu.memory_space<vmem>>, vector<1x64xf32>
    tpu.vector_store %arg10[%c30, %c0_131], %129 {strides = array<i32>} : memref<48x64xf32, #tpu.memory_space<vmem>>, vector<1x64xf32>,
    %c7_132 = arith.constant 7 : index
    %c3_133 = arith.constant 3 : index
    %131 = memref.load %arg1[%c7_132, %c3_133] : memref<8x6xi32, #tpu.memory_space<smem>>
    %132 = arith.index_cast %131 : i32 to index
    %c0_134 = arith.constant 0 : index
    %133 = vector.load %arg9[%132, %c0_134] : memref<20x64xf32, #tpu.memory_space<vmem>>, vector<1x64xf32>
    %c31 = arith.constant 31 : index
    %c0_135 = arith.constant 0 : index
    %134 = vector.load %arg10[%c31, %c0_135] : memref<48x64xf32, #tpu.memory_space<vmem>>, vector<1x64xf32>
    tpu.vector_store %arg10[%c31, %c0_135], %133 {strides = array<i32>} : memref<48x64xf32, #tpu.memory_space<vmem>>, vector<1x64xf32>,
    %c0_136 = arith.constant 0 : index
    %c4_137 = arith.constant 4 : index
    %135 = memref.load %arg1[%c0_136, %c4_137] : memref<8x6xi32, #tpu.memory_space<smem>>
    %136 = arith.index_cast %135 : i32 to index
    %c0_138 = arith.constant 0 : index
    %137 = vector.load %arg9[%136, %c0_138] : memref<20x64xf32, #tpu.memory_space<vmem>>, vector<1x64xf32>
    %c32 = arith.constant 32 : index
    %c0_139 = arith.constant 0 : index
    %138 = vector.load %arg10[%c32, %c0_139] : memref<48x64xf32, #tpu.memory_space<vmem>>, vector<1x64xf32>
    tpu.vector_store %arg10[%c32, %c0_139], %137 {strides = array<i32>} : memref<48x64xf32, #tpu.memory_space<vmem>>, vector<1x64xf32>,
    %c1_140 = arith.constant 1 : index
    %c4_141 = arith.constant 4 : index
    %139 = memref.load %arg1[%c1_140, %c4_141] : memref<8x6xi32, #tpu.memory_space<smem>>
    %140 = arith.index_cast %139 : i32 to index
    %c0_142 = arith.constant 0 : index
    %141 = vector.load %arg9[%140, %c0_142] : memref<20x64xf32, #tpu.memory_space<vmem>>, vector<1x64xf32>
    %c33 = arith.constant 33 : index
    %c0_143 = arith.constant 0 : index
    %142 = vector.load %arg10[%c33, %c0_143] : memref<48x64xf32, #tpu.memory_space<vmem>>, vector<1x64xf32>
    tpu.vector_store %arg10[%c33, %c0_143], %141 {strides = array<i32>} : memref<48x64xf32, #tpu.memory_space<vmem>>, vector<1x64xf32>,
    %c2_144 = arith.constant 2 : index
    %c4_145 = arith.constant 4 : index
    %143 = memref.load %arg1[%c2_144, %c4_145] : memref<8x6xi32, #tpu.memory_space<smem>>
    %144 = arith.index_cast %143 : i32 to index
    %c0_146 = arith.constant 0 : index
    %145 = vector.load %arg9[%144, %c0_146] : memref<20x64xf32, #tpu.memory_space<vmem>>, vector<1x64xf32>
    %c34 = arith.constant 34 : index
    %c0_147 = arith.constant 0 : index
    %146 = vector.load %arg10[%c34, %c0_147] : memref<48x64xf32, #tpu.memory_space<vmem>>, vector<1x64xf32>
    tpu.vector_store %arg10[%c34, %c0_147], %145 {strides = array<i32>} : memref<48x64xf32, #tpu.memory_space<vmem>>, vector<1x64xf32>,
    %c3_148 = arith.constant 3 : index
    %c4_149 = arith.constant 4 : index
    %147 = memref.load %arg1[%c3_148, %c4_149] : memref<8x6xi32, #tpu.memory_space<smem>>
    %148 = arith.index_cast %147 : i32 to index
    %c0_150 = arith.constant 0 : index
    %149 = vector.load %arg9[%148, %c0_150] : memref<20x64xf32, #tpu.memory_space<vmem>>, vector<1x64xf32>
    %c35 = arith.constant 35 : index
    %c0_151 = arith.constant 0 : index
    %150 = vector.load %arg10[%c35, %c0_151] : memref<48x64xf32, #tpu.memory_space<vmem>>, vector<1x64xf32>
    tpu.vector_store %arg10[%c35, %c0_151], %149 {strides = array<i32>} : memref<48x64xf32, #tpu.memory_space<vmem>>, vector<1x64xf32>,
    %c4_152 = arith.constant 4 : index
    %c4_153 = arith.constant 4 : index
    %151 = memref.load %arg1[%c4_152, %c4_153] : memref<8x6xi32, #tpu.memory_space<smem>>
    %152 = arith.index_cast %151 : i32 to index
    %c0_154 = arith.constant 0 : index
    %153 = vector.load %arg9[%152, %c0_154] : memref<20x64xf32, #tpu.memory_space<vmem>>, vector<1x64xf32>
    %c36 = arith.constant 36 : index
    %c0_155 = arith.constant 0 : index
    %154 = vector.load %arg10[%c36, %c0_155] : memref<48x64xf32, #tpu.memory_space<vmem>>, vector<1x64xf32>
    tpu.vector_store %arg10[%c36, %c0_155], %153 {strides = array<i32>} : memref<48x64xf32, #tpu.memory_space<vmem>>, vector<1x64xf32>,
    %c5_156 = arith.constant 5 : index
    %c4_157 = arith.constant 4 : index
    %155 = memref.load %arg1[%c5_156, %c4_157] : memref<8x6xi32, #tpu.memory_space<smem>>
    %156 = arith.index_cast %155 : i32 to index
    %c0_158 = arith.constant 0 : index
    %157 = vector.load %arg9[%156, %c0_158] : memref<20x64xf32, #tpu.memory_space<vmem>>, vector<1x64xf32>
    %c37 = arith.constant 37 : index
    %c0_159 = arith.constant 0 : index
    %158 = vector.load %arg10[%c37, %c0_159] : memref<48x64xf32, #tpu.memory_space<vmem>>, vector<1x64xf32>
    tpu.vector_store %arg10[%c37, %c0_159], %157 {strides = array<i32>} : memref<48x64xf32, #tpu.memory_space<vmem>>, vector<1x64xf32>,
    %c6_160 = arith.constant 6 : index
    %c4_161 = arith.constant 4 : index
    %159 = memref.load %arg1[%c6_160, %c4_161] : memref<8x6xi32, #tpu.memory_space<smem>>
    %160 = arith.index_cast %159 : i32 to index
    %c0_162 = arith.constant 0 : index
    %161 = vector.load %arg9[%160, %c0_162] : memref<20x64xf32, #tpu.memory_space<vmem>>, vector<1x64xf32>
    %c38 = arith.constant 38 : index
    %c0_163 = arith.constant 0 : index
    %162 = vector.load %arg10[%c38, %c0_163] : memref<48x64xf32, #tpu.memory_space<vmem>>, vector<1x64xf32>
    tpu.vector_store %arg10[%c38, %c0_163], %161 {strides = array<i32>} : memref<48x64xf32, #tpu.memory_space<vmem>>, vector<1x64xf32>,
    %c7_164 = arith.constant 7 : index
    %c4_165 = arith.constant 4 : index
    %163 = memref.load %arg1[%c7_164, %c4_165] : memref<8x6xi32, #tpu.memory_space<smem>>
    %164 = arith.index_cast %163 : i32 to index
    %c0_166 = arith.constant 0 : index
    %165 = vector.load %arg9[%164, %c0_166] : memref<20x64xf32, #tpu.memory_space<vmem>>, vector<1x64xf32>
    %c39 = arith.constant 39 : index
    %c0_167 = arith.constant 0 : index
    %166 = vector.load %arg10[%c39, %c0_167] : memref<48x64xf32, #tpu.memory_space<vmem>>, vector<1x64xf32>
    tpu.vector_store %arg10[%c39, %c0_167], %165 {strides = array<i32>} : memref<48x64xf32, #tpu.memory_space<vmem>>, vector<1x64xf32>,
    %c0_168 = arith.constant 0 : index
    %c5_169 = arith.constant 5 : index
    %167 = memref.load %arg1[%c0_168, %c5_169] : memref<8x6xi32, #tpu.memory_space<smem>>
    %168 = arith.index_cast %167 : i32 to index
    %c0_170 = arith.constant 0 : index
    %169 = vector.load %arg9[%168, %c0_170] : memref<20x64xf32, #tpu.memory_space<vmem>>, vector<1x64xf32>
    %c40 = arith.constant 40 : index
    %c0_171 = arith.constant 0 : index
    %170 = vector.load %arg10[%c40, %c0_171] : memref<48x64xf32, #tpu.memory_space<vmem>>, vector<1x64xf32>
    tpu.vector_store %arg10[%c40, %c0_171], %169 {strides = array<i32>} : memref<48x64xf32, #tpu.memory_space<vmem>>, vector<1x64xf32>,
    %c1_172 = arith.constant 1 : index
    %c5_173 = arith.constant 5 : index
    %171 = memref.load %arg1[%c1_172, %c5_173] : memref<8x6xi32, #tpu.memory_space<smem>>
    %172 = arith.index_cast %171 : i32 to index
    %c0_174 = arith.constant 0 : index
    %173 = vector.load %arg9[%172, %c0_174] : memref<20x64xf32, #tpu.memory_space<vmem>>, vector<1x64xf32>
    %c41 = arith.constant 41 : index
    %c0_175 = arith.constant 0 : index
    %174 = vector.load %arg10[%c41, %c0_175] : memref<48x64xf32, #tpu.memory_space<vmem>>, vector<1x64xf32>
    tpu.vector_store %arg10[%c41, %c0_175], %173 {strides = array<i32>} : memref<48x64xf32, #tpu.memory_space<vmem>>, vector<1x64xf32>,
    %c2_176 = arith.constant 2 : index
    %c5_177 = arith.constant 5 : index
    %175 = memref.load %arg1[%c2_176, %c5_177] : memref<8x6xi32, #tpu.memory_space<smem>>
    %176 = arith.index_cast %175 : i32 to index
    %c0_178 = arith.constant 0 : index
    %177 = vector.load %arg9[%176, %c0_178] : memref<20x64xf32, #tpu.memory_space<vmem>>, vector<1x64xf32>
    %c42 = arith.constant 42 : index
    %c0_179 = arith.constant 0 : index
    %178 = vector.load %arg10[%c42, %c0_179] : memref<48x64xf32, #tpu.memory_space<vmem>>, vector<1x64xf32>
    tpu.vector_store %arg10[%c42, %c0_179], %177 {strides = array<i32>} : memref<48x64xf32, #tpu.memory_space<vmem>>, vector<1x64xf32>,
    %c3_180 = arith.constant 3 : index
    %c5_181 = arith.constant 5 : index
    %179 = memref.load %arg1[%c3_180, %c5_181] : memref<8x6xi32, #tpu.memory_space<smem>>
    %180 = arith.index_cast %179 : i32 to index
    %c0_182 = arith.constant 0 : index
    %181 = vector.load %arg9[%180, %c0_182] : memref<20x64xf32, #tpu.memory_space<vmem>>, vector<1x64xf32>
    %c43 = arith.constant 43 : index
    %c0_183 = arith.constant 0 : index
    %182 = vector.load %arg10[%c43, %c0_183] : memref<48x64xf32, #tpu.memory_space<vmem>>, vector<1x64xf32>
    tpu.vector_store %arg10[%c43, %c0_183], %181 {strides = array<i32>} : memref<48x64xf32, #tpu.memory_space<vmem>>, vector<1x64xf32>,
    %c4_184 = arith.constant 4 : index
    %c5_185 = arith.constant 5 : index
    %183 = memref.load %arg1[%c4_184, %c5_185] : memref<8x6xi32, #tpu.memory_space<smem>>
    %184 = arith.index_cast %183 : i32 to index
    %c0_186 = arith.constant 0 : index
    %185 = vector.load %arg9[%184, %c0_186] : memref<20x64xf32, #tpu.memory_space<vmem>>, vector<1x64xf32>
    %c44 = arith.constant 44 : index
    %c0_187 = arith.constant 0 : index
    %186 = vector.load %arg10[%c44, %c0_187] : memref<48x64xf32, #tpu.memory_space<vmem>>, vector<1x64xf32>
    tpu.vector_store %arg10[%c44, %c0_187], %185 {strides = array<i32>} : memref<48x64xf32, #tpu.memory_space<vmem>>, vector<1x64xf32>,
    %c5_188 = arith.constant 5 : index
    %c5_189 = arith.constant 5 : index
    %187 = memref.load %arg1[%c5_188, %c5_189] : memref<8x6xi32, #tpu.memory_space<smem>>
    %188 = arith.index_cast %187 : i32 to index
    %c0_190 = arith.constant 0 : index
    %189 = vector.load %arg9[%188, %c0_190] : memref<20x64xf32, #tpu.memory_space<vmem>>, vector<1x64xf32>
    %c45 = arith.constant 45 : index
    %c0_191 = arith.constant 0 : index
    %190 = vector.load %arg10[%c45, %c0_191] : memref<48x64xf32, #tpu.memory_space<vmem>>, vector<1x64xf32>
    tpu.vector_store %arg10[%c45, %c0_191], %189 {strides = array<i32>} : memref<48x64xf32, #tpu.memory_space<vmem>>, vector<1x64xf32>,
    %c6_192 = arith.constant 6 : index
    %c5_193 = arith.constant 5 : index
    %191 = memref.load %arg1[%c6_192, %c5_193] : memref<8x6xi32, #tpu.memory_space<smem>>
    %192 = arith.index_cast %191 : i32 to index
    %c0_194 = arith.constant 0 : index
    %193 = vector.load %arg9[%192, %c0_194] : memref<20x64xf32, #tpu.memory_space<vmem>>, vector<1x64xf32>
    %c46 = arith.constant 46 : index
    %c0_195 = arith.constant 0 : index
    %194 = vector.load %arg10[%c46, %c0_195] : memref<48x64xf32, #tpu.memory_space<vmem>>, vector<1x64xf32>
    tpu.vector_store %arg10[%c46, %c0_195], %193 {strides = array<i32>} : memref<48x64xf32, #tpu.memory_space<vmem>>, vector<1x64xf32>,
    %c7_196 = arith.constant 7 : index
    %c5_197 = arith.constant 5 : index
    %195 = memref.load %arg1[%c7_196, %c5_197] : memref<8x6xi32, #tpu.memory_space<smem>>
    %196 = arith.index_cast %195 : i32 to index
    %c0_198 = arith.constant 0 : index
    %197 = vector.load %arg9[%196, %c0_198] : memref<20x64xf32, #tpu.memory_space<vmem>>, vector<1x64xf32>
    %c47 = arith.constant 47 : index
    %c0_199 = arith.constant 0 : index
    %198 = vector.load %arg10[%c47, %c0_199] : memref<48x64xf32, #tpu.memory_space<vmem>>, vector<1x64xf32>
    tpu.vector_store %arg10[%c47, %c0_199], %197 {strides = array<i32>} : memref<48x64xf32, #tpu.memory_space<vmem>>, vector<1x64xf32>,
    %cst_200 = arith.constant 0.000000e+00 : f32
    %199 = vector.broadcast %cst_200 : f32 to vector<8x64xf32>
    %c0_201 = arith.constant 0 : index
    %c0_202 = arith.constant 0 : index
    %200 = vector.load %arg11[%c0_201, %c0_202] : memref<8x64xf32, #tpu.memory_space<vmem>>, vector<8x64xf32>
    tpu.vector_store %arg11[%c0_201, %c0_202], %199 {strides = array<i32>} : memref<8x64xf32, #tpu.memory_space<vmem>>, vector<8x64xf32>,
    %c0_203 = arith.constant 0 : index
    %c0_204 = arith.constant 0 : index
    %201 = vector.load %arg4[%c0_203, %c0_204] : memref<64x64xf32, #tpu.memory_space<vmem>>, vector<64x64xf32>
    %c0_205 = arith.constant 0 : index
    %c0_206 = arith.constant 0 : index
    %202 = vector.load %arg10[%c0_205, %c0_206] : memref<48x64xf32, #tpu.memory_space<vmem>>, vector<8x64xf32>
    %c0_207 = arith.constant 0 : index
    %c0_208 = arith.constant 0 : index
    %203 = vector.load %arg11[%c0_207, %c0_208] : memref<8x64xf32, #tpu.memory_space<vmem>>, vector<8x64xf32>
    %cst_209 = arith.constant dense<0.000000e+00> : vector<8x64xf32>
    %204 = tpu.matmul %203, %201, %cst_209 {dimension_numbers = #tpu.dot_dimension_numbers<[1], [0], [0], [1], [0, 0, 1, 1], [], []>} : vector<8x64xf32>, vector<64x64xf32>, vector<8x64xf32> -> vector<8x64xf32>
    %205 = arith.addf %202, %204 : vector<8x64xf32>
    %206 = math.tanh %205 : vector<8x64xf32>
    %c0_210 = arith.constant 0 : index
    %c0_211 = arith.constant 0 : index
    %207 = vector.load %arg11[%c0_210, %c0_211] : memref<8x64xf32, #tpu.memory_space<vmem>>, vector<8x64xf32>
    tpu.vector_store %arg11[%c0_210, %c0_211], %206 {strides = array<i32>} : memref<8x64xf32, #tpu.memory_space<vmem>>, vector<8x64xf32>,
    %c8_212 = arith.constant 8 : index
    %c0_213 = arith.constant 0 : index
    %208 = vector.load %arg10[%c8_212, %c0_213] : memref<48x64xf32, #tpu.memory_space<vmem>>, vector<8x64xf32>
    %c0_214 = arith.constant 0 : index
    %c0_215 = arith.constant 0 : index
    %209 = vector.load %arg11[%c0_214, %c0_215] : memref<8x64xf32, #tpu.memory_space<vmem>>, vector<8x64xf32>
    %cst_216 = arith.constant dense<0.000000e+00> : vector<8x64xf32>
    %210 = tpu.matmul %209, %201, %cst_216 {dimension_numbers = #tpu.dot_dimension_numbers<[1], [0], [0], [1], [0, 0, 1, 1], [], []>} : vector<8x64xf32>, vector<64x64xf32>, vector<8x64xf32> -> vector<8x64xf32>
    %211 = arith.addf %208, %210 : vector<8x64xf32>
    %212 = math.tanh %211 : vector<8x64xf32>
    %c0_217 = arith.constant 0 : index
    %c0_218 = arith.constant 0 : index
    %213 = vector.load %arg11[%c0_217, %c0_218] : memref<8x64xf32, #tpu.memory_space<vmem>>, vector<8x64xf32>
    tpu.vector_store %arg11[%c0_217, %c0_218], %212 {strides = array<i32>} : memref<8x64xf32, #tpu.memory_space<vmem>>, vector<8x64xf32>,
    %c16_219 = arith.constant 16 : index
    %c0_220 = arith.constant 0 : index
    %214 = vector.load %arg10[%c16_219, %c0_220] : memref<48x64xf32, #tpu.memory_space<vmem>>, vector<8x64xf32>
    %c0_221 = arith.constant 0 : index
    %c0_222 = arith.constant 0 : index
    %215 = vector.load %arg11[%c0_221, %c0_222] : memref<8x64xf32, #tpu.memory_space<vmem>>, vector<8x64xf32>
    %cst_223 = arith.constant dense<0.000000e+00> : vector<8x64xf32>
    %216 = tpu.matmul %215, %201, %cst_223 {dimension_numbers = #tpu.dot_dimension_numbers<[1], [0], [0], [1], [0, 0, 1, 1], [], []>} : vector<8x64xf32>, vector<64x64xf32>, vector<8x64xf32> -> vector<8x64xf32>
    %217 = arith.addf %214, %216 : vector<8x64xf32>
    %218 = math.tanh %217 : vector<8x64xf32>
    %c0_224 = arith.constant 0 : index
    %c0_225 = arith.constant 0 : index
    %219 = vector.load %arg11[%c0_224, %c0_225] : memref<8x64xf32, #tpu.memory_space<vmem>>, vector<8x64xf32>
    tpu.vector_store %arg11[%c0_224, %c0_225], %218 {strides = array<i32>} : memref<8x64xf32, #tpu.memory_space<vmem>>, vector<8x64xf32>,
    %c24_226 = arith.constant 24 : index
    %c0_227 = arith.constant 0 : index
    %220 = vector.load %arg10[%c24_226, %c0_227] : memref<48x64xf32, #tpu.memory_space<vmem>>, vector<8x64xf32>
    %c0_228 = arith.constant 0 : index
    %c0_229 = arith.constant 0 : index
    %221 = vector.load %arg11[%c0_228, %c0_229] : memref<8x64xf32, #tpu.memory_space<vmem>>, vector<8x64xf32>
    %cst_230 = arith.constant dense<0.000000e+00> : vector<8x64xf32>
    %222 = tpu.matmul %221, %201, %cst_230 {dimension_numbers = #tpu.dot_dimension_numbers<[1], [0], [0], [1], [0, 0, 1, 1], [], []>} : vector<8x64xf32>, vector<64x64xf32>, vector<8x64xf32> -> vector<8x64xf32>
    %223 = arith.addf %220, %222 : vector<8x64xf32>
    %224 = math.tanh %223 : vector<8x64xf32>
    %c0_231 = arith.constant 0 : index
    %c0_232 = arith.constant 0 : index
    %225 = vector.load %arg11[%c0_231, %c0_232] : memref<8x64xf32, #tpu.memory_space<vmem>>, vector<8x64xf32>
    tpu.vector_store %arg11[%c0_231, %c0_232], %224 {strides = array<i32>} : memref<8x64xf32, #tpu.memory_space<vmem>>, vector<8x64xf32>,
    %c32_233 = arith.constant 32 : index
    %c0_234 = arith.constant 0 : index
    %226 = vector.load %arg10[%c32_233, %c0_234] : memref<48x64xf32, #tpu.memory_space<vmem>>, vector<8x64xf32>
    %c0_235 = arith.constant 0 : index
    %c0_236 = arith.constant 0 : index
    %227 = vector.load %arg11[%c0_235, %c0_236] : memref<8x64xf32, #tpu.memory_space<vmem>>, vector<8x64xf32>
    %cst_237 = arith.constant dense<0.000000e+00> : vector<8x64xf32>
    %228 = tpu.matmul %227, %201, %cst_237 {dimension_numbers = #tpu.dot_dimension_numbers<[1], [0], [0], [1], [0, 0, 1, 1], [], []>} : vector<8x64xf32>, vector<64x64xf32>, vector<8x64xf32> -> vector<8x64xf32>
    %229 = arith.addf %226, %228 : vector<8x64xf32>
    %230 = math.tanh %229 : vector<8x64xf32>
    %c0_238 = arith.constant 0 : index
    %c0_239 = arith.constant 0 : index
    %231 = vector.load %arg11[%c0_238, %c0_239] : memref<8x64xf32, #tpu.memory_space<vmem>>, vector<8x64xf32>
    tpu.vector_store %arg11[%c0_238, %c0_239], %230 {strides = array<i32>} : memref<8x64xf32, #tpu.memory_space<vmem>>, vector<8x64xf32>,
    %c40_240 = arith.constant 40 : index
    %c0_241 = arith.constant 0 : index
    %232 = vector.load %arg10[%c40_240, %c0_241] : memref<48x64xf32, #tpu.memory_space<vmem>>, vector<8x64xf32>
    %c0_242 = arith.constant 0 : index
    %c0_243 = arith.constant 0 : index
    %233 = vector.load %arg11[%c0_242, %c0_243] : memref<8x64xf32, #tpu.memory_space<vmem>>, vector<8x64xf32>
    %cst_244 = arith.constant dense<0.000000e+00> : vector<8x64xf32>
    %234 = tpu.matmul %233, %201, %cst_244 {dimension_numbers = #tpu.dot_dimension_numbers<[1], [0], [0], [1], [0, 0, 1, 1], [], []>} : vector<8x64xf32>, vector<64x64xf32>, vector<8x64xf32> -> vector<8x64xf32>
    %235 = arith.addf %232, %234 : vector<8x64xf32>
    %236 = math.tanh %235 : vector<8x64xf32>
    %c0_245 = arith.constant 0 : index
    %c0_246 = arith.constant 0 : index
    %237 = vector.load %arg11[%c0_245, %c0_246] : memref<8x64xf32, #tpu.memory_space<vmem>>, vector<8x64xf32>
    tpu.vector_store %arg11[%c0_245, %c0_246], %236 {strides = array<i32>} : memref<8x64xf32, #tpu.memory_space<vmem>>, vector<8x64xf32>,
    %c0_247 = arith.constant 0 : index
    %c0_248 = arith.constant 0 : index
    %238 = vector.load %arg11[%c0_247, %c0_248] : memref<8x64xf32, #tpu.memory_space<vmem>>, vector<8x64xf32>
    %c0_249 = arith.constant 0 : index
    %c0_250 = arith.constant 0 : index
    %239 = vector.load %arg6[%c0_249, %c0_250] : memref<64x128xf32, #tpu.memory_space<vmem>>, vector<64x128xf32>
    %cst_251 = arith.constant dense<0.000000e+00> : vector<8x128xf32>
    %240 = tpu.matmul %238, %239, %cst_251 {dimension_numbers = #tpu.dot_dimension_numbers<[1], [0], [0], [1], [0, 0, 1, 1], [], []>} : vector<8x64xf32>, vector<64x128xf32>, vector<8x128xf32> -> vector<8x128xf32>
    %c0_252 = arith.constant 0 : index
    %c0_253 = arith.constant 0 : index
    %241 = vector.load %arg7[%c0_252, %c0_253] : memref<1x128xf32, #tpu.memory_space<vmem>>, vector<1x128xf32>
    %242 = vector.broadcast %241 : vector<1x128xf32> to vector<8x128xf32>
    %243 = arith.addf %240, %242 : vector<8x128xf32>
    %c0_254 = arith.constant 0 : index
    %c0_255 = arith.constant 0 : index
    %244 = vector.load %arg8[%c0_254, %c0_255] : memref<8x128xf32, #tpu.memory_space<vmem>>, vector<8x128xf32>
    tpu.vector_store %arg8[%c0_254, %c0_255], %243 {strides = array<i32>} : memref<8x128xf32, #tpu.memory_space<vmem>>, vector<8x128xf32>,
    return
  }
  func.func @transform_0(%arg0: i32, %arg1: memref<8x6xi32, #tpu.memory_space<smem>>) -> (i32, i32) {
    %c0_i32 = arith.constant 0 : i32
    %c0_i32_0 = arith.constant 0 : i32
    %c0_i32_1 = arith.constant 0 : i32
    return %c0_i32, %c0_i32_0 : i32, i32
  }
  func.func @transform_1(%arg0: i32, %arg1: memref<8x6xi32, #tpu.memory_space<smem>>) -> (i32, i32) {
    %c0_i32 = arith.constant 0 : i32
    %c0_i32_0 = arith.constant 0 : i32
    %c0_i32_1 = arith.constant 0 : i32
    return %c0_i32, %c0_i32_0 : i32, i32
  }
  func.func @transform_2(%arg0: i32, %arg1: memref<8x6xi32, #tpu.memory_space<smem>>) -> (i32, i32) {
    %c0_i32 = arith.constant 0 : i32
    %c0_i32_0 = arith.constant 0 : i32
    %c0_i32_1 = arith.constant 0 : i32
    return %c0_i32, %c0_i32_0 : i32, i32
  }
  func.func @transform_3(%arg0: i32, %arg1: memref<8x6xi32, #tpu.memory_space<smem>>) -> (i32, i32) {
    %c0_i32 = arith.constant 0 : i32
    %c0_i32_0 = arith.constant 0 : i32
    %c0_i32_1 = arith.constant 0 : i32
    return %c0_i32, %c0_i32_0 : i32, i32
  }
  func.func @transform_4(%arg0: i32, %arg1: memref<8x6xi32, #tpu.memory_space<smem>>) -> (i32, i32) {
    %c0_i32 = arith.constant 0 : i32
    %c0_i32_0 = arith.constant 0 : i32
    %c0_i32_1 = arith.constant 0 : i32
    return %c0_i32, %c0_i32_0 : i32, i32
  }
  func.func @transform_5(%arg0: i32, %arg1: memref<8x6xi32, #tpu.memory_space<smem>>) -> (i32, i32) {
    %c0_i32 = arith.constant 0 : i32
    %c0_i32_0 = arith.constant 0 : i32
    %c0_i32_1 = arith.constant 0 : i32
    return %c0_i32, %c0_i32_0 : i32, i32
  }
  func.func @transform_6(%arg0: i32, %arg1: memref<8x6xi32, #tpu.memory_space<smem>>) -> (i32, i32) {
    %c0_i32 = arith.constant 0 : i32
    %c0_i32_0 = arith.constant 0 : i32
    %c0_i32_1 = arith.constant 0 : i32
    return %c0_i32, %c0_i32_0 : i32, i32
  }
}

</mosaic_0001>

<llo_original>
// kernel: torch_model_forward.1
$region0: #{torch_model_forward.1}
  #allocation0 [shape = 'u32[]', space=smem, size = 0x4, offset = 0x4, fixed_abs, tag = 'smem constant byte address 0x4 - core index']
  #allocation1 [shape = 'u32[144,128]{1,0:T(1,128)}', space=vmem, size = 0x12000, scoped, tag = 'internal scratch']
  #allocation2 [shape = 'f32[20,64]{1,0:T(8,128)}', space=vmem, size = 0x3000, scoped, tag = 'scratch operand']
  #allocation3 [shape = 'f32[48,64]{1,0:T(8,128)}', space=vmem, size = 0x6000, scoped, tag = 'scratch operand']
  #allocation4 [shape = 'f32[8,64]{1,0:T(8,128)}', space=vmem, size = 0x1000, scoped, tag = 'scratch operand']
  #allocation5 [shape = 's32[1]{0}', space=sflag, size = 0x4, scoped, tag = 'scoped memory for torch_model_forward.1']
  #allocation6 [shape = 'u8[4096]{0}', space=smem, size = 0x1000, scoped, tag = 'prefetched SMEM operand 0']
  %s0 = inlined_call_operand.vmem [shape: s32[8,6], index: 0, kind: input, shape index: {}]
  %s1 = inlined_call_operand.vmem [shape: f32[20,16], index: 1, kind: input, shape index: {}]
  %s2 = inlined_call_operand.vmem [shape: f32[16,64], index: 2, kind: input, shape index: {}]
  %s3 = inlined_call_operand.hbm [shape: f32[64,64], index: 3, kind: input, shape index: {}]
  %s4 = inlined_call_operand.vmem [shape: f32[1,64], index: 4, kind: input, shape index: {}]
  %s5 = inlined_call_operand.hbm [shape: f32[64,128], index: 5, kind: input, shape index: {}]
  %s6 = inlined_call_operand.vmem [shape: f32[1,128], index: 6, kind: input, shape index: {}]
  %s7 = inlined_call_operand.hbm [shape: f32[8,128], index: 7, kind: output, shape index: {}]
  %s8 = sld [smem:[#allocation0]]
  $region42: #{torch_model_forward.1} parent=0
    _
  %s10 = ssub.s32 1, %s8
  %s11 = scalar_select 0, %s10, %s8
  %s12 = sshll.u32 %s0, 4
  %s13 = int_to_ptr.vmem [resolvable:$true] %s12
  %15 = dma.vmem_to_smem %s13, 128, [#allocation6], [#allocation5]
  %16 = dma.done [#allocation5], 128
  %17 = sfence
  $region1: #{torch_model_forward.1} parent=0
    #allocation7 [shape = 'u8[32768]{0}', space=vmem, size = 0x8000, scoped, tag = 'input window, operand 3, single buffered']
    #allocation8 [shape = 's32[1]{0}', space=sflag, size = 0x4, scoped, tag = 'scoped memory for torch_model_forward.1']
    #allocation9 [shape = 's32[1]{0}', space=sflag, size = 0x4, scoped, tag = 'scoped memory for torch_model_forward.1']
    #allocation10 [shape = 'u8[32768]{0}', space=vmem, size = 0x8000, scoped, tag = 'input window, operand 5, single buffered']
    #allocation11 [shape = 's32[1]{0}', space=sflag, size = 0x4, scoped, tag = 'scoped memory for torch_model_forward.1']
    #allocation12 [shape = 'u8[4096]{0}', space=vmem, size = 0x1000, scoped, tag = 'output window, operand 0, single buffered']
    %18 = vsyncpa [#allocation8], 0
    %19 = vsyncpa [#allocation11], 0
    %20 = vsyncpa [#allocation9], 0
    // Predicated region
    $region2: #{torch_model_forward.1} parent=1 // pred_check
      _
    $region3: #{torch_model_forward.1} parent=1 // pred_check_branch
      %22 = sbr.rel (0) target = $region5
    $region4: #{torch_model_forward.1} parent=1 // pred_region
      _
    $region5: #{torch_model_forward.1} parent=1 // pred_fallthru
      _
    // Predicated region
    $region6: #{torch_model_forward.1} parent=1 // pred_check
      _
    $region7: #{torch_model_forward.1} parent=1 // pred_check_branch
      %24 = sbr.rel (0) target = $region9
    $region8: #{torch_model_forward.1} parent=1 // pred_region
      _
    $region9: #{torch_model_forward.1} parent=1 // pred_fallthru
      _
    // Predicated region
    $region10: #{torch_model_forward.1} parent=1 // pred_check
      _
    $region11: #{torch_model_forward.1} parent=1 // pred_check_branch
      %26 = sbr.rel (0) target = $region13
    $region12: #{torch_model_forward.1} parent=1 // pred_region
      %s28 = ssub.s32 1024, 1024
      %29 = vsyncadd [#allocation8], %s28
      %s30 = sshll.u32 [#allocation7], 4
      %s31 = int_to_ptr.vmem [resolvable:$true] %s30
      %36 = dma.hbm_to_vmem [thread:$0]  %s3, 1024, %s31, [#allocation8], 128, 128, 8
    $region13: #{torch_model_forward.1} parent=1 // pred_fallthru
      _
    // Predicated region
    $region14: #{torch_model_forward.1} parent=1 // pred_check
      _
    $region15: #{torch_model_forward.1} parent=1 // pred_check_branch
      %38 = sbr.rel (0) target = $region17
    $region16: #{torch_model_forward.1} parent=1 // pred_region
      _
    $region17: #{torch_model_forward.1} parent=1 // pred_fallthru
      _
    // Predicated region
    $region18: #{torch_model_forward.1} parent=1 // pred_check
      _
    $region19: #{torch_model_forward.1} parent=1 // pred_check_branch
      %40 = sbr.rel (0) target = $region21
    $region20: #{torch_model_forward.1} parent=1 // pred_region
      %s42 = ssub.s32 1024, 1024
      %43 = vsyncadd [#allocation11], %s42
      %s44 = sshll.u32 [#allocation10], 4
      %s45 = int_to_ptr.vmem [resolvable:$true] %s44
      %50 = dma.hbm_to_vmem [thread:$0]  %s5, 1024, %s45, [#allocation11], 128, 128, 8
    $region21: #{torch_model_forward.1} parent=1 // pred_fallthru
      _
    // Predicated region
    $region22: #{torch_model_forward.1} parent=1 // pred_check
      _
    $region23: #{torch_model_forward.1} parent=1 // pred_check_branch
      %52 = sbr.rel (0) target = $region25
    $region24: #{torch_model_forward.1} parent=1 // pred_region
      _
    $region25: #{torch_model_forward.1} parent=1 // pred_fallthru
      _
    // Predicated region
    $region26: #{torch_model_forward.1} parent=1 // pred_check
      _
    $region27: #{torch_model_forward.1} parent=1 // pred_check_branch
      %54 = sbr.rel (0) target = $region29
    $region28: #{torch_model_forward.1} parent=1 // pred_region
      %55 = dma.done [#allocation8], 1024
    $region29: #{torch_model_forward.1} parent=1 // pred_fallthru
      _
    // Predicated region
    $region30: #{torch_model_forward.1} parent=1 // pred_check
      _
    $region31: #{torch_model_forward.1} parent=1 // pred_check_branch
      %57 = sbr.rel (0) target = $region33
    $region32: #{torch_model_forward.1} parent=1 // pred_region
      %58 = dma.done [#allocation11], 1024
    $region33: #{torch_model_forward.1} parent=1 // pred_fallthru
      _
    %v59 = vld [vmem:[%s1] sm:$0xff]
    %v60 = vld [vmem:[%s1 + $0x8] sm:$0xff]
    %v61 = vld [vmem:[%s1 + $0x10] sm:$0xf]
    %v62 = vld [vmem:[%s2] sm:$0xff]
    %v63 = vld [vmem:[%s2 + $0x8] sm:$0xff]
    %v64 = vld [vmem:[%s4] sm:$0x1]
    %v66 = vlaneseq
    %v67 = vshrl.u32 %v66, 7
    %v68 = vsub.s32 0, %v67
    %v69 = vrot.slane %v64, %v68
    %vm71 = vcmask 130048
    %v73 = vsel %vm71, %v59, 0
    %v76 = vsel %vm71, %v60, 0
    %v79 = vsel %vm71, %v61, 0
    %81 = vmatprep.subr.mxu0 0.0
    %82 = vmatpush1.msra.mxu0 %v62
    %83 = vmatprep.subr.mxu0 0.0
    %84 = vmatpush1.msra.mxu0 %v63
    %85 = vmatprep.subr.mxu0 0.0
    %86 = vmatpush1.msra.mxu0 0.0
    %87 = vmatprep.subr.mxu0 0.0
    %88 = vmatpush1.msra.mxu0 0.0
    %89 = vmatprep.subr.mxu0 0.0
    %90 = vmatpush1.msra.mxu0 0.0
    %91 = vmatprep.subr.mxu0 0.0
    %92 = vmatpush1.msra.mxu0 0.0
    %93 = vmatprep.subr.mxu0 0.0
    %94 = vmatpush1.msra.mxu0 0.0
    %95 = vmatprep.subr.mxu0 0.0
    %96 = vmatpush1.msra.mxu0 0.0
    %97 = vmatprep.subr.mxu0 0.0
    %98 = vmatpush1.msra.mxu0 0.0
    %99 = vmatprep.subr.mxu0 0.0
    %100 = vmatpush1.msra.mxu0 0.0
    %101 = vmatprep.subr.mxu0 0.0
    %102 = vmatpush1.msra.mxu0 0.0
    %103 = vmatprep.subr.mxu0 0.0
    %104 = vmatpush1.msra.mxu0 0.0
    %105 = vmatprep.subr.mxu0 0.0
    %106 = vmatpush1.msra.mxu0 0.0
    %107 = vmatprep.subr.mxu0 0.0
    %108 = vmatpush1.msra.mxu0 0.0
    %109 = vmatprep.subr.mxu0 0.0
    %110 = vmatpush1.msra.mxu0 0.0
    %111 = vmatprep.subr.mxu0 0.0
    %112 = vmatpush1.msra.mxu0 0.0
    %113 = vmatprep.subr.mxu0 0.0
    %114 = vmatpush1.msra.mxu0 0.0
    %115 = vmatprep.subr.mxu0 0.0
    %116 = vmatpush1.msra.mxu0 0.0
    %117 = vmatprep.subr.mxu0 0.0
    %118 = vmatpush1.msra.mxu0 0.0
    %119 = vmatprep.subr.mxu0 0.0
    %120 = vmatpush1.msra.mxu0 0.0
    %121 = vmatprep.subr.mxu0 0.0
    %122 = vmatpush1.msra.mxu0 0.0
    %123 = vmatprep.subr.mxu0 0.0
    %124 = vmatpush1.msra.mxu0 0.0
    %125 = vmatprep.subr.mxu0 0.0
    %126 = vmatpush1.msra.mxu0 0.0
    %127 = vmatprep.subr.mxu0 0.0
    %128 = vmatpush1.msra.mxu0 0.0
    %129 = vmatprep.subr.mxu0 0.0
    %130 = vmatpush1.msra.mxu0 0.0
    %131 = vmatprep.subr.mxu0 0.0
    %132 = vmatpush1.msra.mxu0 0.0
    %133 = vmatprep.subr.mxu0 0.0
    %134 = vmatpush1.msra.mxu0 0.0
    %135 = vmatprep.subr.mxu0 0.0
    %136 = vmatpush1.msra.mxu0 0.0
    %137 = vmatprep.subr.mxu0 0.0
    %138 = vmatpush1.msra.mxu0 0.0
    %139 = vmatprep.subr.mxu0 0.0
    %140 = vmatpush1.msra.mxu0 0.0
    %141 = vmatprep.subr.mxu0 0.0
    %142 = vmatpush1.msra.mxu0 0.0
    %143 = vmatprep.subr.mxu0 0.0
    %144 = vmatpush1.msra.mxu0 0.0
    %145 = vmatprep.mubr.f32.mxu0 0.0
    %146 = vmatmul.mubr.f32.gmra.mrb[0].mxu0 %v73
    %v147 = vpop.f32.mrb[0].mxu0
    %v148 = vadd.f32 %v69, %v147
    %v149 = vpop.f32.mrb[0].mxu0
    %150 = vmatprep.mubr.f32.mxu0 0.0
    %151 = vmatmul.mubr.f32.gmra.mrb[0].mxu0 %v76
    %v152 = vpop.f32.mrb[0].mxu0
    %v153 = vadd.f32 %v69, %v152
    %v154 = vpop.f32.mrb[0].mxu0
    %155 = vmatprep.mubr.f32.mxu0 0.0
    %156 = vmatmul.mubr.f32.gmra.mrb[0].mxu0 %v79
    %v157 = vpop.f32.mrb[0].mxu0
    %v158 = vadd.f32 %v69, %v157
    %v159 = vpop.f32.mrb[0].mxu0
    %160 = vdwg.mxu0
    %vm161 = vcmask 523264
    %162 = vst.msk [vmem:[#allocation2] sm:$0xff] %vm161, %v148
    %163 = vst.msk [vmem:[#allocation2 + $0x8] sm:$0xff] %vm161, %v153
    %vm164 = vcmask 519168
    %165 = vst.msk [vmem:[#allocation2 + $0x10] sm:$0xf] %vm164, %v158
    %s166 = sld [smem:[#allocation6]]
    %s167 = scalar_lea.vmem [#allocation2], %s166
    %v168 = vld [vmem:[%s167] sm:$0x1]
    %vm169 = vcmask 516096
    %170 = vst.msk [vmem:[#allocation3] sm:$0x1] %vm169, %v168
    %s171 = sld [smem:[#allocation6 + $0x80]]
    %s172 = scalar_lea.vmem [#allocation2], %s171
    %v173 = vld [vmem:[%s172] sm:$0x1]
    %174 = vst.msk [vmem:[#allocation3 + $0x1] sm:$0x1] %vm169, %v173
    %s175 = sld [smem:[#allocation6 + $0x100]]
    %s176 = scalar_lea.vmem [#allocation2], %s175
    %v177 = vld [vmem:[%s176] sm:$0x1]
    %178 = vst.msk [vmem:[#allocation3 + $0x2] sm:$0x1] %vm169, %v177
    %s179 = sld [smem:[#allocation6 + $0x180]]
    %s180 = scalar_lea.vmem [#allocation2], %s179
    %v181 = vld [vmem:[%s180] sm:$0x1]
    %182 = vst.msk [vmem:[#allocation3 + $0x3] sm:$0x1] %vm169, %v181
    %s183 = sld [smem:[#allocation6 + $0x200]]
    %s184 = scalar_lea.vmem [#allocation2], %s183
    %v185 = vld [vmem:[%s184] sm:$0x1]
    %186 = vst.msk [vmem:[#allocation3 + $0x4] sm:$0x1] %vm169, %v185
    %s187 = sld [smem:[#allocation6 + $0x280]]
    %s188 = scalar_lea.vmem [#allocation2], %s187
    %v189 = vld [vmem:[%s188] sm:$0x1]
    %190 = vst.msk [vmem:[#allocation3 + $0x5] sm:$0x1] %vm169, %v189
    %s191 = sld [smem:[#allocation6 + $0x300]]
    %s192 = scalar_lea.vmem [#allocation2], %s191
    %v193 = vld [vmem:[%s192] sm:$0x1]
    %194 = vst.msk [vmem:[#allocation3 + $0x6] sm:$0x1] %vm169, %v193
    %s195 = sld [smem:[#allocation6 + $0x380]]
    %s196 = scalar_lea.vmem [#allocation2], %s195
    %v197 = vld [vmem:[%s196] sm:$0x1]
    %198 = vst.msk [vmem:[#allocation3 + $0x7] sm:$0x1] %vm169, %v197
    %s199 = sld [smem:[#allocation6 + $0x1]]
    %s200 = scalar_lea.vmem [#allocation2], %s199
    %v201 = vld [vmem:[%s200] sm:$0x1]
    %202 = vst.msk [vmem:[#allocation3 + $0x8] sm:$0x1] %vm169, %v201
    %s203 = sld [smem:[#allocation6 + $0x81]]
    %s204 = scalar_lea.vmem [#allocation2], %s203
    %v205 = vld [vmem:[%s204] sm:$0x1]
    %206 = vst.msk [vmem:[#allocation3 + $0x9] sm:$0x1] %vm169, %v205
    %s207 = sld [smem:[#allocation6 + $0x101]]
    %s208 = scalar_lea.vmem [#allocation2], %s207
    %v209 = vld [vmem:[%s208] sm:$0x1]
    %210 = vst.msk [vmem:[#allocation3 + $0xa] sm:$0x1] %vm169, %v209
    %s211 = sld [smem:[#allocation6 + $0x181]]
    %s212 = scalar_lea.vmem [#allocation2], %s211
    %v213 = vld [vmem:[%s212] sm:$0x1]
    %214 = vst.msk [vmem:[#allocation3 + $0xb] sm:$0x1] %vm169, %v213
    %s215 = sld [smem:[#allocation6 + $0x201]]
    %s216 = scalar_lea.vmem [#allocation2], %s215
    %v217 = vld [vmem:[%s216] sm:$0x1]
    %218 = vst.msk [vmem:[#allocation3 + $0xc] sm:$0x1] %vm169, %v217
    %s219 = sld [smem:[#allocation6 + $0x281]]
    %s220 = scalar_lea.vmem [#allocation2], %s219
    %v221 = vld [vmem:[%s220] sm:$0x1]
    %222 = vst.msk [vmem:[#allocation3 + $0xd] sm:$0x1] %vm169, %v221
    %s223 = sld [smem:[#allocation6 + $0x301]]
    %s224 = scalar_lea.vmem [#allocation2], %s223
    %v225 = vld [vmem:[%s224] sm:$0x1]
    %226 = vst.msk [vmem:[#allocation3 + $0xe] sm:$0x1] %vm169, %v225
    %s227 = sld [smem:[#allocation6 + $0x381]]
    %s228 = scalar_lea.vmem [#allocation2], %s227
    %v229 = vld [vmem:[%s228] sm:$0x1]
    %230 = vst.msk [vmem:[#allocation3 + $0xf] sm:$0x1] %vm169, %v229
    %s231 = sld [smem:[#allocation6 + $0x2]]
    %s232 = scalar_lea.vmem [#allocation2], %s231
    %v233 = vld [vmem:[%s232] sm:$0x1]
    %234 = vst.msk [vmem:[#allocation3 + $0x10] sm:$0x1] %vm169, %v233
    %s235 = sld [smem:[#allocation6 + $0x82]]
    %s236 = scalar_lea.vmem [#allocation2], %s235
    %v237 = vld [vmem:[%s236] sm:$0x1]
    %238 = vst.msk [vmem:[#allocation3 + $0x11] sm:$0x1] %vm169, %v237
    %s239 = sld [smem:[#allocation6 + $0x102]]
    %s240 = scalar_lea.vmem [#allocation2], %s239
    %v241 = vld [vmem:[%s240] sm:$0x1]
    %242 = vst.msk [vmem:[#allocation3 + $0x12] sm:$0x1] %vm169, %v241
    %s243 = sld [smem:[#allocation6 + $0x182]]
    %s244 = scalar_lea.vmem [#allocation2], %s243
    %v245 = vld [vmem:[%s244] sm:$0x1]
    %246 = vst.msk [vmem:[#allocation3 + $0x13] sm:$0x1] %vm169, %v245
    %s247 = sld [smem:[#allocation6 + $0x202]]
    %s248 = scalar_lea.vmem [#allocation2], %s247
    %v249 = vld [vmem:[%s248] sm:$0x1]
    %250 = vst.msk [vmem:[#allocation3 + $0x14] sm:$0x1] %vm169, %v249
    %s251 = sld [smem:[#allocation6 + $0x282]]
    %s252 = scalar_lea.vmem [#allocation2], %s251
    %v253 = vld [vmem:[%s252] sm:$0x1]
    %254 = vst.msk [vmem:[#allocation3 + $0x15] sm:$0x1] %vm169, %v253
    %s255 = sld [smem:[#allocation6 + $0x302]]
    %s256 = scalar_lea.vmem [#allocation2], %s255
    %v257 = vld [vmem:[%s256] sm:$0x1]
    %258 = vst.msk [vmem:[#allocation3 + $0x16] sm:$0x1] %vm169, %v257
    %s259 = sld [smem:[#allocation6 + $0x382]]
    %s260 = scalar_lea.vmem [#allocation2], %s259
    %v261 = vld [vmem:[%s260] sm:$0x1]
    %262 = vst.msk [vmem:[#allocation3 + $0x17] sm:$0x1] %vm169, %v261
    %s263 = sld [smem:[#allocation6 + $0x3]]
    %s264 = scalar_lea.vmem [#allocation2], %s263
    %v265 = vld [vmem:[%s264] sm:$0x1]
    %266 = vst.msk [vmem:[#allocation3 + $0x18] sm:$0x1] %vm169, %v265
    %s267 = sld [smem:[#allocation6 + $0x83]]
    %s268 = scalar_lea.vmem [#allocation2], %s267
    %v269 = vld [vmem:[%s268] sm:$0x1]
    %270 = vst.msk [vmem:[#allocation3 + $0x19] sm:$0x1] %vm169, %v269
    %s271 = sld [smem:[#allocation6 + $0x103]]
    %s272 = scalar_lea.vmem [#allocation2], %s271
    %v273 = vld [vmem:[%s272] sm:$0x1]
    %274 = vst.msk [vmem:[#allocation3 + $0x1a] sm:$0x1] %vm169, %v273
    %s275 = sld [smem:[#allocation6 + $0x183]]
    %s276 = scalar_lea.vmem [#allocation2], %s275
    %v277 = vld [vmem:[%s276] sm:$0x1]
    %278 = vst.msk [vmem:[#allocation3 + $0x1b] sm:$0x1] %vm169, %v277
    %s279 = sld [smem:[#allocation6 + $0x203]]
    %s280 = scalar_lea.vmem [#allocation2], %s279
    %v281 = vld [vmem:[%s280] sm:$0x1]
    %282 = vst.msk [vmem:[#allocation3 + $0x1c] sm:$0x1] %vm169, %v281
    %s283 = sld [smem:[#allocation6 + $0x283]]
    %s284 = scalar_lea.vmem [#allocation2], %s283
    %v285 = vld [vmem:[%s284] sm:$0x1]
    %286 = vst.msk [vmem:[#allocation3 + $0x1d] sm:$0x1] %vm169, %v285
    %s287 = sld [smem:[#allocation6 + $0x303]]
    %s288 = scalar_lea.vmem [#allocation2], %s287
    %v289 = vld [vmem:[%s288] sm:$0x1]
    %290 = vst.msk [vmem:[#allocation3 + $0x1e] sm:$0x1] %vm169, %v289
    %s291 = sld [smem:[#allocation6 + $0x383]]
    %s292 = scalar_lea.vmem [#allocation2], %s291
    %v293 = vld [vmem:[%s292] sm:$0x1]
    %294 = vst.msk [vmem:[#allocation3 + $0x1f] sm:$0x1] %vm169, %v293
    %s295 = sld [smem:[#allocation6 + $0x4]]
    %s296 = scalar_lea.vmem [#allocation2], %s295
    %v297 = vld [vmem:[%s296] sm:$0x1]
    %298 = vst.msk [vmem:[#allocation3 + $0x20] sm:$0x1] %vm169, %v297
    %s299 = sld [smem:[#allocation6 + $0x84]]
    %s300 = scalar_lea.vmem [#allocation2], %s299
    %v301 = vld [vmem:[%s300] sm:$0x1]
    %302 = vst.msk [vmem:[#allocation3 + $0x21] sm:$0x1] %vm169, %v301
    %s303 = sld [smem:[#allocation6 + $0x104]]
    %s304 = scalar_lea.vmem [#allocation2], %s303
    %v305 = vld [vmem:[%s304] sm:$0x1]
    %306 = vst.msk [vmem:[#allocation3 + $0x22] sm:$0x1] %vm169, %v305
    %s307 = sld [smem:[#allocation6 + $0x184]]
    %s308 = scalar_lea.vmem [#allocation2], %s307
    %v309 = vld [vmem:[%s308] sm:$0x1]
    %310 = vst.msk [vmem:[#allocation3 + $0x23] sm:$0x1] %vm169, %v309
    %s311 = sld [smem:[#allocation6 + $0x204]]
    %s312 = scalar_lea.vmem [#allocation2], %s311
    %v313 = vld [vmem:[%s312] sm:$0x1]
    %314 = vst.msk [vmem:[#allocation3 + $0x24] sm:$0x1] %vm169, %v313
    %s315 = sld [smem:[#allocation6 + $0x284]]
    %s316 = scalar_lea.vmem [#allocation2], %s315
    %v317 = vld [vmem:[%s316] sm:$0x1]
    %318 = vst.msk [vmem:[#allocation3 + $0x25] sm:$0x1] %vm169, %v317
    %s319 = sld [smem:[#allocation6 + $0x304]]
    %s320 = scalar_lea.vmem [#allocation2], %s319
    %v321 = vld [vmem:[%s320] sm:$0x1]
    %322 = vst.msk [vmem:[#allocation3 + $0x26] sm:$0x1] %vm169, %v321
    %s323 = sld [smem:[#allocation6 + $0x384]]
    %s324 = scalar_lea.vmem [#allocation2], %s323
    %v325 = vld [vmem:[%s324] sm:$0x1]
    %326 = vst.msk [vmem:[#allocation3 + $0x27] sm:$0x1] %vm169, %v325
    %s327 = sld [smem:[#allocation6 + $0x5]]
    %s328 = scalar_lea.vmem [#allocation2], %s327
    %v329 = vld [vmem:[%s328] sm:$0x1]
    %330 = vst.msk [vmem:[#allocation3 + $0x28] sm:$0x1] %vm169, %v329
    %s331 = sld [smem:[#allocation6 + $0x85]]
    %s332 = scalar_lea.vmem [#allocation2], %s331
    %v333 = vld [vmem:[%s332] sm:$0x1]
    %334 = vst.msk [vmem:[#allocation3 + $0x29] sm:$0x1] %vm169, %v333
    %s335 = sld [smem:[#allocation6 + $0x105]]
    %s336 = scalar_lea.vmem [#allocation2], %s335
    %v337 = vld [vmem:[%s336] sm:$0x1]
    %338 = vst.msk [vmem:[#allocation3 + $0x2a] sm:$0x1] %vm169, %v337
    %s339 = sld [smem:[#allocation6 + $0x185]]
    %s340 = scalar_lea.vmem [#allocation2], %s339
    %v341 = vld [vmem:[%s340] sm:$0x1]
    %342 = vst.msk [vmem:[#allocation3 + $0x2b] sm:$0x1] %vm169, %v341
    %s343 = sld [smem:[#allocation6 + $0x205]]
    %s344 = scalar_lea.vmem [#allocation2], %s343
    %v345 = vld [vmem:[%s344] sm:$0x1]
    %346 = vst.msk [vmem:[#allocation3 + $0x2c] sm:$0x1] %vm169, %v345
    %s347 = sld [smem:[#allocation6 + $0x285]]
    %s348 = scalar_lea.vmem [#allocation2], %s347
    %v349 = vld [vmem:[%s348] sm:$0x1]
    %350 = vst.msk [vmem:[#allocation3 + $0x2d] sm:$0x1] %vm169, %v349
    %s351 = sld [smem:[#allocation6 + $0x305]]
    %s352 = scalar_lea.vmem [#allocation2], %s351
    %v353 = vld [vmem:[%s352] sm:$0x1]
    %354 = vst.msk [vmem:[#allocation3 + $0x2e] sm:$0x1] %vm169, %v353
    %s355 = sld [smem:[#allocation6 + $0x385]]
    %s356 = scalar_lea.vmem [#allocation2], %s355
    %v357 = vld [vmem:[%s356] sm:$0x1]
    %358 = vst.msk [vmem:[#allocation3 + $0x2f] sm:$0x1] %vm169, %v357
    %359 = vst.msk [vmem:[#allocation4] sm:$0xff] %vm161, 0.0
    %v360 = vld [vmem:[#allocation7] sm:$0xff]
    %v361 = vld [vmem:[#allocation7 + $0x8] sm:$0xff]
    %v362 = vld [vmem:[#allocation7 + $0x10] sm:$0xff]
    %v363 = vld [vmem:[#allocation7 + $0x18] sm:$0xff]
    %v364 = vld [vmem:[#allocation7 + $0x20] sm:$0xff]
    %v365 = vld [vmem:[#allocation7 + $0x28] sm:$0xff]
    %v366 = vld [vmem:[#allocation7 + $0x30] sm:$0xff]
    %v367 = vld [vmem:[#allocation7 + $0x38] sm:$0xff]
    %v368 = vld [vmem:[#allocation3] sm:$0xff]
    %v369 = vld [vmem:[#allocation4] sm:$0xff]
    %v371 = vsel %vm161, %v369, 0
    %373 = vmatprep.subr.mxu0 0.0
    %374 = vmatpush1.msra.mxu0 %v360
    %375 = vmatprep.subr.mxu0 0.0
    %376 = vmatpush1.msra.mxu0 %v361
    %377 = vmatprep.subr.mxu0 0.0
    %378 = vmatpush1.msra.mxu0 %v362
    %379 = vmatprep.subr.mxu0 0.0
    %380 = vmatpush1.msra.mxu0 %v363
    %381 = vmatprep.subr.mxu0 0.0
    %382 = vmatpush1.msra.mxu0 %v364
    %383 = vmatprep.subr.mxu0 0.0
    %384 = vmatpush1.msra.mxu0 %v365
    %385 = vmatprep.subr.mxu0 0.0
    %386 = vmatpush1.msra.mxu0 %v366
    %387 = vmatprep.subr.mxu0 0.0
    %388 = vmatpush1.msra.mxu0 %v367
    %389 = vmatprep.subr.mxu0 0.0
    %390 = vmatpush1.msra.mxu0 0.0
    %391 = vmatprep.subr.mxu0 0.0
    %392 = vmatpush1.msra.mxu0 0.0
    %393 = vmatprep.subr.mxu0 0.0
    %394 = vmatpush1.msra.mxu0 0.0
    %395 = vmatprep.subr.mxu0 0.0
    %396 = vmatpush1.msra.mxu0 0.0
    %397 = vmatprep.subr.mxu0 0.0
    %398 = vmatpush1.msra.mxu0 0.0
    %399 = vmatprep.subr.mxu0 0.0
    %400 = vmatpush1.msra.mxu0 0.0
    %401 = vmatprep.subr.mxu0 0.0
    %402 = vmatpush1.msra.mxu0 0.0
    %403 = vmatprep.subr.mxu0 0.0
    %404 = vmatpush1.msra.mxu0 0.0
    %405 = vmatprep.subr.mxu0 0.0
    %406 = vmatpush1.msra.mxu0 0.0
    %407 = vmatprep.subr.mxu0 0.0
    %408 = vmatpush1.msra.mxu0 0.0
    %409 = vmatprep.subr.mxu0 0.0
    %410 = vmatpush1.msra.mxu0 0.0
    %411 = vmatprep.subr.mxu0 0.0
    %412 = vmatpush1.msra.mxu0 0.0
    %413 = vmatprep.subr.mxu0 0.0
    %414 = vmatpush1.msra.mxu0 0.0
    %415 = vmatprep.subr.mxu0 0.0
    %416 = vmatpush1.msra.mxu0 0.0
    %417 = vmatprep.subr.mxu0 0.0
    %418 = vmatpush1.msra.mxu0 0.0
    %419 = vmatprep.subr.mxu0 0.0
    %420 = vmatpush1.msra.mxu0 0.0
    %421 = vmatprep.subr.mxu0 0.0
    %422 = vmatpush1.msra.mxu0 0.0
    %423 = vmatprep.subr.mxu0 0.0
    %424 = vmatpush1.msra.mxu0 0.0
    %425 = vmatprep.subr.mxu0 0.0
    %426 = vmatpush1.msra.mxu0 0.0
    %427 = vmatprep.subr.mxu0 0.0
    %428 = vmatpush1.msra.mxu0 0.0
    %429 = vmatprep.subr.mxu0 0.0
    %430 = vmatpush1.msra.mxu0 0.0
    %431 = vmatprep.subr.mxu0 0.0
    %432 = vmatpush1.msra.mxu0 0.0
    %433 = vmatprep.subr.mxu0 0.0
    %434 = vmatpush1.msra.mxu0 0.0
    %435 = vmatprep.subr.mxu0 0.0
    %436 = vmatpush1.msra.mxu0 0.0
    %437 = vmatprep.mubr.f32.mxu0 0.0
    %438 = vmatmul.mubr.f32.gmra.mrb[0].mxu0 %v371
    %v439 = vpop.f32.mrb[0].mxu0
    %v440 = vadd.f32 0.0, %v439
    %v441 = vpop.f32.mrb[0].mxu0
    %442 = vdwg.mxu0
    %v443 = vadd.f32 %v368, %v440
    %v444 = vtanh.pop %v443
    %445 = vst.msk [vmem:[#allocation4] sm:$0xff] %vm161, %v444
    %v446 = vld [vmem:[#allocation3 + $0x8] sm:$0xff]
    %v447 = vld [vmem:[#allocation4] sm:$0xff]
    %v449 = vsel %vm161, %v447, 0
    %451 = vmatprep.subr.mxu0 0.0
    %452 = vmatpush1.msra.mxu0 %v360
    %453 = vmatprep.subr.mxu0 0.0
    %454 = vmatpush1.msra.mxu0 %v361
    %455 = vmatprep.subr.mxu0 0.0
    %456 = vmatpush1.msra.mxu0 %v362
    %457 = vmatprep.subr.mxu0 0.0
    %458 = vmatpush1.msra.mxu0 %v363
    %459 = vmatprep.subr.mxu0 0.0
    %460 = vmatpush1.msra.mxu0 %v364
    %461 = vmatprep.subr.mxu0 0.0
    %462 = vmatpush1.msra.mxu0 %v365
    %463 = vmatprep.subr.mxu0 0.0
    %464 = vmatpush1.msra.mxu0 %v366
    %465 = vmatprep.subr.mxu0 0.0
    %466 = vmatpush1.msra.mxu0 %v367
    %467 = vmatprep.subr.mxu0 0.0
    %468 = vmatpush1.msra.mxu0 0.0
    %469 = vmatprep.subr.mxu0 0.0
    %470 = vmatpush1.msra.mxu0 0.0
    %471 = vmatprep.subr.mxu0 0.0
    %472 = vmatpush1.msra.mxu0 0.0
    %473 = vmatprep.subr.mxu0 0.0
    %474 = vmatpush1.msra.mxu0 0.0
    %475 = vmatprep.subr.mxu0 0.0
    %476 = vmatpush1.msra.mxu0 0.0
    %477 = vmatprep.subr.mxu0 0.0
    %478 = vmatpush1.msra.mxu0 0.0
    %479 = vmatprep.subr.mxu0 0.0
    %480 = vmatpush1.msra.mxu0 0.0
    %481 = vmatprep.subr.mxu0 0.0
    %482 = vmatpush1.msra.mxu0 0.0
    %483 = vmatprep.subr.mxu0 0.0
    %484 = vmatpush1.msra.mxu0 0.0
    %485 = vmatprep.subr.mxu0 0.0
    %486 = vmatpush1.msra.mxu0 0.0
    %487 = vmatprep.subr.mxu0 0.0
    %488 = vmatpush1.msra.mxu0 0.0
    %489 = vmatprep.subr.mxu0 0.0
    %490 = vmatpush1.msra.mxu0 0.0
    %491 = vmatprep.subr.mxu0 0.0
    %492 = vmatpush1.msra.mxu0 0.0
    %493 = vmatprep.subr.mxu0 0.0
    %494 = vmatpush1.msra.mxu0 0.0
    %495 = vmatprep.subr.mxu0 0.0
    %496 = vmatpush1.msra.mxu0 0.0
    %497 = vmatprep.subr.mxu0 0.0
    %498 = vmatpush1.msra.mxu0 0.0
    %499 = vmatprep.subr.mxu0 0.0
    %500 = vmatpush1.msra.mxu0 0.0
    %501 = vmatprep.subr.mxu0 0.0
    %502 = vmatpush1.msra.mxu0 0.0
    %503 = vmatprep.subr.mxu0 0.0
    %504 = vmatpush1.msra.mxu0 0.0
    %505 = vmatprep.subr.mxu0 0.0
    %506 = vmatpush1.msra.mxu0 0.0
    %507 = vmatprep.subr.mxu0 0.0
    %508 = vmatpush1.msra.mxu0 0.0
    %509 = vmatprep.subr.mxu0 0.0
    %510 = vmatpush1.msra.mxu0 0.0
    %511 = vmatprep.subr.mxu0 0.0
    %512 = vmatpush1.msra.mxu0 0.0
    %513 = vmatprep.subr.mxu0 0.0
    %514 = vmatpush1.msra.mxu0 0.0
    %515 = vmatprep.mubr.f32.mxu0 0.0
    %516 = vmatmul.mubr.f32.gmra.mrb[0].mxu0 %v449
    %v517 = vpop.f32.mrb[0].mxu0
    %v518 = vadd.f32 0.0, %v517
    %v519 = vpop.f32.mrb[0].mxu0
    %520 = vdwg.mxu0
    %v521 = vadd.f32 %v446, %v518
    %v522 = vtanh.pop %v521
    %523 = vst.msk [vmem:[#allocation4] sm:$0xff] %vm161, %v522
    %v524 = vld [vmem:[#allocation3 + $0x10] sm:$0xff]
    %v525 = vld [vmem:[#allocation4] sm:$0xff]
    %v527 = vsel %vm161, %v525, 0
    %529 = vmatprep.subr.mxu0 0.0
    %530 = vmatpush1.msra.mxu0 %v360
    %531 = vmatprep.subr.mxu0 0.0
    %532 = vmatpush1.msra.mxu0 %v361
    %533 = vmatprep.subr.mxu0 0.0
    %534 = vmatpush1.msra.mxu0 %v362
    %535 = vmatprep.subr.mxu0 0.0
    %536 = vmatpush1.msra.mxu0 %v363
    %537 = vmatprep.subr.mxu0 0.0
    %538 = vmatpush1.msra.mxu0 %v364
    %539 = vmatprep.subr.mxu0 0.0
    %540 = vmatpush1.msra.mxu0 %v365
    %541 = vmatprep.subr.mxu0 0.0
    %542 = vmatpush1.msra.mxu0 %v366
    %543 = vmatprep.subr.mxu0 0.0
    %544 = vmatpush1.msra.mxu0 %v367
    %545 = vmatprep.subr.mxu0 0.0
    %546 = vmatpush1.msra.mxu0 0.0
    %547 = vmatprep.subr.mxu0 0.0
    %548 = vmatpush1.msra.mxu0 0.0
    %549 = vmatprep.subr.mxu0 0.0
    %550 = vmatpush1.msra.mxu0 0.0
    %551 = vmatprep.subr.mxu0 0.0
    %552 = vmatpush1.msra.mxu0 0.0
    %553 = vmatprep.subr.mxu0 0.0
    %554 = vmatpush1.msra.mxu0 0.0
    %555 = vmatprep.subr.mxu0 0.0
    %556 = vmatpush1.msra.mxu0 0.0
    %557 = vmatprep.subr.mxu0 0.0
    %558 = vmatpush1.msra.mxu0 0.0
    %559 = vmatprep.subr.mxu0 0.0
    %560 = vmatpush1.msra.mxu0 0.0
    %561 = vmatprep.subr.mxu0 0.0
    %562 = vmatpush1.msra.mxu0 0.0
    %563 = vmatprep.subr.mxu0 0.0
    %564 = vmatpush1.msra.mxu0 0.0
    %565 = vmatprep.subr.mxu0 0.0
    %566 = vmatpush1.msra.mxu0 0.0
    %567 = vmatprep.subr.mxu0 0.0
    %568 = vmatpush1.msra.mxu0 0.0
    %569 = vmatprep.subr.mxu0 0.0
    %570 = vmatpush1.msra.mxu0 0.0
    %571 = vmatprep.subr.mxu0 0.0
    %572 = vmatpush1.msra.mxu0 0.0
    %573 = vmatprep.subr.mxu0 0.0
    %574 = vmatpush1.msra.mxu0 0.0
    %575 = vmatprep.subr.mxu0 0.0
    %576 = vmatpush1.msra.mxu0 0.0
    %577 = vmatprep.subr.mxu0 0.0
    %578 = vmatpush1.msra.mxu0 0.0
    %579 = vmatprep.subr.mxu0 0.0
    %580 = vmatpush1.msra.mxu0 0.0
    %581 = vmatprep.subr.mxu0 0.0
    %582 = vmatpush1.msra.mxu0 0.0
    %583 = vmatprep.subr.mxu0 0.0
    %584 = vmatpush1.msra.mxu0 0.0
    %585 = vmatprep.subr.mxu0 0.0
    %586 = vmatpush1.msra.mxu0 0.0
    %587 = vmatprep.subr.mxu0 0.0
    %588 = vmatpush1.msra.mxu0 0.0
    %589 = vmatprep.subr.mxu0 0.0
    %590 = vmatpush1.msra.mxu0 0.0
    %591 = vmatprep.subr.mxu0 0.0
    %592 = vmatpush1.msra.mxu0 0.0
    %593 = vmatprep.mubr.f32.mxu0 0.0
    %594 = vmatmul.mubr.f32.gmra.mrb[0].mxu0 %v527
    %v595 = vpop.f32.mrb[0].mxu0
    %v596 = vadd.f32 0.0, %v595
    %v597 = vpop.f32.mrb[0].mxu0
    %598 = vdwg.mxu0
    %v599 = vadd.f32 %v524, %v596
    %v600 = vtanh.pop %v599
    %601 = vst.msk [vmem:[#allocation4] sm:$0xff] %vm161, %v600
    %v602 = vld [vmem:[#allocation3 + $0x18] sm:$0xff]
    %v603 = vld [vmem:[#allocation4] sm:$0xff]
    %v605 = vsel %vm161, %v603, 0
    %607 = vmatprep.subr.mxu0 0.0
    %608 = vmatpush1.msra.mxu0 %v360
    %609 = vmatprep.subr.mxu0 0.0
    %610 = vmatpush1.msra.mxu0 %v361
    %611 = vmatprep.subr.mxu0 0.0
    %612 = vmatpush1.msra.mxu0 %v362
    %613 = vmatprep.subr.mxu0 0.0
    %614 = vmatpush1.msra.mxu0 %v363
    %615 = vmatprep.subr.mxu0 0.0
    %616 = vmatpush1.msra.mxu0 %v364
    %617 = vmatprep.subr.mxu0 0.0
    %618 = vmatpush1.msra.mxu0 %v365
    %619 = vmatprep.subr.mxu0 0.0
    %620 = vmatpush1.msra.mxu0 %v366
    %621 = vmatprep.subr.mxu0 0.0
    %622 = vmatpush1.msra.mxu0 %v367
    %623 = vmatprep.subr.mxu0 0.0
    %624 = vmatpush1.msra.mxu0 0.0
    %625 = vmatprep.subr.mxu0 0.0
    %626 = vmatpush1.msra.mxu0 0.0
    %627 = vmatprep.subr.mxu0 0.0
    %628 = vmatpush1.msra.mxu0 0.0
    %629 = vmatprep.subr.mxu0 0.0
    %630 = vmatpush1.msra.mxu0 0.0
    %631 = vmatprep.subr.mxu0 0.0
    %632 = vmatpush1.msra.mxu0 0.0
    %633 = vmatprep.subr.mxu0 0.0
    %634 = vmatpush1.msra.mxu0 0.0
    %635 = vmatprep.subr.mxu0 0.0
    %636 = vmatpush1.msra.mxu0 0.0
    %637 = vmatprep.subr.mxu0 0.0
    %638 = vmatpush1.msra.mxu0 0.0
    %639 = vmatprep.subr.mxu0 0.0
    %640 = vmatpush1.msra.mxu0 0.0
    %641 = vmatprep.subr.mxu0 0.0
    %642 = vmatpush1.msra.mxu0 0.0
    %643 = vmatprep.subr.mxu0 0.0
    %644 = vmatpush1.msra.mxu0 0.0
    %645 = vmatprep.subr.mxu0 0.0
    %646 = vmatpush1.msra.mxu0 0.0
    %647 = vmatprep.subr.mxu0 0.0
    %648 = vmatpush1.msra.mxu0 0.0
    %649 = vmatprep.subr.mxu0 0.0
    %650 = vmatpush1.msra.mxu0 0.0
    %651 = vmatprep.subr.mxu0 0.0
    %652 = vmatpush1.msra.mxu0 0.0
    %653 = vmatprep.subr.mxu0 0.0
    %654 = vmatpush1.msra.mxu0 0.0
    %655 = vmatprep.subr.mxu0 0.0
    %656 = vmatpush1.msra.mxu0 0.0
    %657 = vmatprep.subr.mxu0 0.0
    %658 = vmatpush1.msra.mxu0 0.0
    %659 = vmatprep.subr.mxu0 0.0
    %660 = vmatpush1.msra.mxu0 0.0
    %661 = vmatprep.subr.mxu0 0.0
    %662 = vmatpush1.msra.mxu0 0.0
    %663 = vmatprep.subr.mxu0 0.0
    %664 = vmatpush1.msra.mxu0 0.0
    %665 = vmatprep.subr.mxu0 0.0
    %666 = vmatpush1.msra.mxu0 0.0
    %667 = vmatprep.subr.mxu0 0.0
    %668 = vmatpush1.msra.mxu0 0.0
    %669 = vmatprep.subr.mxu0 0.0
    %670 = vmatpush1.msra.mxu0 0.0
    %671 = vmatprep.mubr.f32.mxu0 0.0
    %672 = vmatmul.mubr.f32.gmra.mrb[0].mxu0 %v605
    %v673 = vpop.f32.mrb[0].mxu0
    %v674 = vadd.f32 0.0, %v673
    %v675 = vpop.f32.mrb[0].mxu0
    %676 = vdwg.mxu0
    %v677 = vadd.f32 %v602, %v674
    %v678 = vtanh.pop %v677
    %679 = vst.msk [vmem:[#allocation4] sm:$0xff] %vm161, %v678
    %v680 = vld [vmem:[#allocation3 + $0x20] sm:$0xff]
    %v681 = vld [vmem:[#allocation4] sm:$0xff]
    %v683 = vsel %vm161, %v681, 0
    %685 = vmatprep.subr.mxu0 0.0
    %686 = vmatpush1.msra.mxu0 %v360
    %687 = vmatprep.subr.mxu0 0.0
    %688 = vmatpush1.msra.mxu0 %v361
    %689 = vmatprep.subr.mxu0 0.0
    %690 = vmatpush1.msra.mxu0 %v362
    %691 = vmatprep.subr.mxu0 0.0
    %692 = vmatpush1.msra.mxu0 %v363
    %693 = vmatprep.subr.mxu0 0.0
    %694 = vmatpush1.msra.mxu0 %v364
    %695 = vmatprep.subr.mxu0 0.0
    %696 = vmatpush1.msra.mxu0 %v365
    %697 = vmatprep.subr.mxu0 0.0
    %698 = vmatpush1.msra.mxu0 %v366
    %699 = vmatprep.subr.mxu0 0.0
    %700 = vmatpush1.msra.mxu0 %v367
    %701 = vmatprep.subr.mxu0 0.0
    %702 = vmatpush1.msra.mxu0 0.0
    %703 = vmatprep.subr.mxu0 0.0
    %704 = vmatpush1.msra.mxu0 0.0
    %705 = vmatprep.subr.mxu0 0.0
    %706 = vmatpush1.msra.mxu0 0.0
    %707 = vmatprep.subr.mxu0 0.0
    %708 = vmatpush1.msra.mxu0 0.0
    %709 = vmatprep.subr.mxu0 0.0
    %710 = vmatpush1.msra.mxu0 0.0
    %711 = vmatprep.subr.mxu0 0.0
    %712 = vmatpush1.msra.mxu0 0.0
    %713 = vmatprep.subr.mxu0 0.0
    %714 = vmatpush1.msra.mxu0 0.0
    %715 = vmatprep.subr.mxu0 0.0
    %716 = vmatpush1.msra.mxu0 0.0
    %717 = vmatprep.subr.mxu0 0.0
    %718 = vmatpush1.msra.mxu0 0.0
    %719 = vmatprep.subr.mxu0 0.0
    %720 = vmatpush1.msra.mxu0 0.0
    %721 = vmatprep.subr.mxu0 0.0
    %722 = vmatpush1.msra.mxu0 0.0
    %723 = vmatprep.subr.mxu0 0.0
    %724 = vmatpush1.msra.mxu0 0.0
    %725 = vmatprep.subr.mxu0 0.0
    %726 = vmatpush1.msra.mxu0 0.0
    %727 = vmatprep.subr.mxu0 0.0
    %728 = vmatpush1.msra.mxu0 0.0
    %729 = vmatprep.subr.mxu0 0.0
    %730 = vmatpush1.msra.mxu0 0.0
    %731 = vmatprep.subr.mxu0 0.0
    %732 = vmatpush1.msra.mxu0 0.0
    %733 = vmatprep.subr.mxu0 0.0
    %734 = vmatpush1.msra.mxu0 0.0
    %735 = vmatprep.subr.mxu0 0.0
    %736 = vmatpush1.msra.mxu0 0.0
    %737 = vmatprep.subr.mxu0 0.0
    %738 = vmatpush1.msra.mxu0 0.0
    %739 = vmatprep.subr.mxu0 0.0
    %740 = vmatpush1.msra.mxu0 0.0
    %741 = vmatprep.subr.mxu0 0.0
    %742 = vmatpush1.msra.mxu0 0.0
    %743 = vmatprep.subr.mxu0 0.0
    %744 = vmatpush1.msra.mxu0 0.0
    %745 = vmatprep.subr.mxu0 0.0
    %746 = vmatpush1.msra.mxu0 0.0
    %747 = vmatprep.subr.mxu0 0.0
    %748 = vmatpush1.msra.mxu0 0.0
    %749 = vmatprep.mubr.f32.mxu0 0.0
    %750 = vmatmul.mubr.f32.gmra.mrb[0].mxu0 %v683
    %v751 = vpop.f32.mrb[0].mxu0
    %v752 = vadd.f32 0.0, %v751
    %v753 = vpop.f32.mrb[0].mxu0
    %754 = vdwg.mxu0
    %v755 = vadd.f32 %v680, %v752
    %v756 = vtanh.pop %v755
    %757 = vst.msk [vmem:[#allocation4] sm:$0xff] %vm161, %v756
    %v758 = vld [vmem:[#allocation3 + $0x28] sm:$0xff]
    %v759 = vld [vmem:[#allocation4] sm:$0xff]
    %v761 = vsel %vm161, %v759, 0
    %763 = vmatprep.subr.mxu0 0.0
    %764 = vmatpush1.msra.mxu0 %v360
    %765 = vmatprep.subr.mxu0 0.0
    %766 = vmatpush1.msra.mxu0 %v361
    %767 = vmatprep.subr.mxu0 0.0
    %768 = vmatpush1.msra.mxu0 %v362
    %769 = vmatprep.subr.mxu0 0.0
    %770 = vmatpush1.msra.mxu0 %v363
    %771 = vmatprep.subr.mxu0 0.0
    %772 = vmatpush1.msra.mxu0 %v364
    %773 = vmatprep.subr.mxu0 0.0
    %774 = vmatpush1.msra.mxu0 %v365
    %775 = vmatprep.subr.mxu0 0.0
    %776 = vmatpush1.msra.mxu0 %v366
    %777 = vmatprep.subr.mxu0 0.0
    %778 = vmatpush1.msra.mxu0 %v367
    %779 = vmatprep.subr.mxu0 0.0
    %780 = vmatpush1.msra.mxu0 0.0
    %781 = vmatprep.subr.mxu0 0.0
    %782 = vmatpush1.msra.mxu0 0.0
    %783 = vmatprep.subr.mxu0 0.0
    %784 = vmatpush1.msra.mxu0 0.0
    %785 = vmatprep.subr.mxu0 0.0
    %786 = vmatpush1.msra.mxu0 0.0
    %787 = vmatprep.subr.mxu0 0.0
    %788 = vmatpush1.msra.mxu0 0.0
    %789 = vmatprep.subr.mxu0 0.0
    %790 = vmatpush1.msra.mxu0 0.0
    %791 = vmatprep.subr.mxu0 0.0
    %792 = vmatpush1.msra.mxu0 0.0
    %793 = vmatprep.subr.mxu0 0.0
    %794 = vmatpush1.msra.mxu0 0.0
    %795 = vmatprep.subr.mxu0 0.0
    %796 = vmatpush1.msra.mxu0 0.0
    %797 = vmatprep.subr.mxu0 0.0
    %798 = vmatpush1.msra.mxu0 0.0
    %799 = vmatprep.subr.mxu0 0.0
    %800 = vmatpush1.msra.mxu0 0.0
    %801 = vmatprep.subr.mxu0 0.0
    %802 = vmatpush1.msra.mxu0 0.0
    %803 = vmatprep.subr.mxu0 0.0
    %804 = vmatpush1.msra.mxu0 0.0
    %805 = vmatprep.subr.mxu0 0.0
    %806 = vmatpush1.msra.mxu0 0.0
    %807 = vmatprep.subr.mxu0 0.0
    %808 = vmatpush1.msra.mxu0 0.0
    %809 = vmatprep.subr.mxu0 0.0
    %810 = vmatpush1.msra.mxu0 0.0
    %811 = vmatprep.subr.mxu0 0.0
    %812 = vmatpush1.msra.mxu0 0.0
    %813 = vmatprep.subr.mxu0 0.0
    %814 = vmatpush1.msra.mxu0 0.0
    %815 = vmatprep.subr.mxu0 0.0
    %816 = vmatpush1.msra.mxu0 0.0
    %817 = vmatprep.subr.mxu0 0.0
    %818 = vmatpush1.msra.mxu0 0.0
    %819 = vmatprep.subr.mxu0 0.0
    %820 = vmatpush1.msra.mxu0 0.0
    %821 = vmatprep.subr.mxu0 0.0
    %822 = vmatpush1.msra.mxu0 0.0
    %823 = vmatprep.subr.mxu0 0.0
    %824 = vmatpush1.msra.mxu0 0.0
    %825 = vmatprep.subr.mxu0 0.0
    %826 = vmatpush1.msra.mxu0 0.0
    %827 = vmatprep.mubr.f32.mxu0 0.0
    %828 = vmatmul.mubr.f32.gmra.mrb[0].mxu0 %v761
    %v829 = vpop.f32.mrb[0].mxu0
    %v830 = vadd.f32 0.0, %v829
    %v831 = vpop.f32.mrb[0].mxu0
    %832 = vdwg.mxu0
    %v833 = vadd.f32 %v758, %v830
    %v834 = vtanh.pop %v833
    %835 = vst.msk [vmem:[#allocation4] sm:$0xff] %vm161, %v834
    %v836 = vld [vmem:[#allocation4] sm:$0xff]
    %v837 = vld [vmem:[#allocation10] sm:$0xff]
    %v838 = vld [vmem:[#allocation10 + $0x8] sm:$0xff]
    %v839 = vld [vmem:[#allocation10 + $0x10] sm:$0xff]
    %v840 = vld [vmem:[#allocation10 + $0x18] sm:$0xff]
    %v841 = vld [vmem:[#allocation10 + $0x20] sm:$0xff]
    %v842 = vld [vmem:[#allocation10 + $0x28] sm:$0xff]
    %v843 = vld [vmem:[#allocation10 + $0x30] sm:$0xff]
    %v844 = vld [vmem:[#allocation10 + $0x38] sm:$0xff]
    %v845 = vld [vmem:[%s6] sm:$0x1]
    %v847 = vlaneseq
    %v848 = vshrl.u32 %v847, 7
    %v849 = vsub.s32 0, %v848
    %v850 = vrot.slane %v845, %v849
    %v853 = vsel %vm161, %v836, 0
    %855 = vmatprep.subr.mxu0 0.0
    %856 = vmatpush1.msra.mxu0 %v837
    %857 = vmatprep.subr.mxu0 0.0
    %858 = vmatpush1.msra.mxu0 %v838
    %859 = vmatprep.subr.mxu0 0.0
    %860 = vmatpush1.msra.mxu0 %v839
    %861 = vmatprep.subr.mxu0 0.0
    %862 = vmatpush1.msra.mxu0 %v840
    %863 = vmatprep.subr.mxu0 0.0
    %864 = vmatpush1.msra.mxu0 %v841
    %865 = vmatprep.subr.mxu0 0.0
    %866 = vmatpush1.msra.mxu0 %v842
    %867 = vmatprep.subr.mxu0 0.0
    %868 = vmatpush1.msra.mxu0 %v843
    %869 = vmatprep.subr.mxu0 0.0
    %870 = vmatpush1.msra.mxu0 %v844
    %871 = vmatprep.subr.mxu0 0.0
    %872 = vmatpush1.msra.mxu0 0.0
    %873 = vmatprep.subr.mxu0 0.0
    %874 = vmatpush1.msra.mxu0 0.0
    %875 = vmatprep.subr.mxu0 0.0
    %876 = vmatpush1.msra.mxu0 0.0
    %877 = vmatprep.subr.mxu0 0.0
    %878 = vmatpush1.msra.mxu0 0.0
    %879 = vmatprep.subr.mxu0 0.0
    %880 = vmatpush1.msra.mxu0 0.0
    %881 = vmatprep.subr.mxu0 0.0
    %882 = vmatpush1.msra.mxu0 0.0
    %883 = vmatprep.subr.mxu0 0.0
    %884 = vmatpush1.msra.mxu0 0.0
    %885 = vmatprep.subr.mxu0 0.0
    %886 = vmatpush1.msra.mxu0 0.0
    %887 = vmatprep.subr.mxu0 0.0
    %888 = vmatpush1.msra.mxu0 0.0
    %889 = vmatprep.subr.mxu0 0.0
    %890 = vmatpush1.msra.mxu0 0.0
    %891 = vmatprep.subr.mxu0 0.0
    %892 = vmatpush1.msra.mxu0 0.0
    %893 = vmatprep.subr.mxu0 0.0
    %894 = vmatpush1.msra.mxu0 0.0
    %895 = vmatprep.subr.mxu0 0.0
    %896 = vmatpush1.msra.mxu0 0.0
    %897 = vmatprep.subr.mxu0 0.0
    %898 = vmatpush1.msra.mxu0 0.0
    %899 = vmatprep.subr.mxu0 0.0
    %900 = vmatpush1.msra.mxu0 0.0
    %901 = vmatprep.subr.mxu0 0.0
    %902 = vmatpush1.msra.mxu0 0.0
    %903 = vmatprep.subr.mxu0 0.0
    %904 = vmatpush1.msra.mxu0 0.0
    %905 = vmatprep.subr.mxu0 0.0
    %906 = vmatpush1.msra.mxu0 0.0
    %907 = vmatprep.subr.mxu0 0.0
    %908 = vmatpush1.msra.mxu0 0.0
    %909 = vmatprep.subr.mxu0 0.0
    %910 = vmatpush1.msra.mxu0 0.0
    %911 = vmatprep.subr.mxu0 0.0
    %912 = vmatpush1.msra.mxu0 0.0
    %913 = vmatprep.subr.mxu0 0.0
    %914 = vmatpush1.msra.mxu0 0.0
    %915 = vmatprep.subr.mxu0 0.0
    %916 = vmatpush1.msra.mxu0 0.0
    %917 = vmatprep.subr.mxu0 0.0
    %918 = vmatpush1.msra.mxu0 0.0
    %919 = vmatprep.mubr.f32.mxu0 0.0
    %920 = vmatmul.mubr.f32.gmra.mrb[0].mxu0 %v853
    %v921 = vpop.f32.mrb[0].mxu0
    %v922 = vadd.f32 %v850, %v921
    %v923 = vpop.f32.mrb[0].mxu0
    %924 = vdwg.mxu0
    %925 = vst [vmem:[#allocation12] sm:$0xff] %v922
    // Predicated region
    $region34: #{torch_model_forward.1} parent=1 // pred_check
      _
    $region35: #{torch_model_forward.1} parent=1 // pred_check_branch
      %927 = sbr.rel (0) target = $region37
    $region36: #{torch_model_forward.1} parent=1 // pred_region
      %s929 = ssub.s32 128, 128
      %930 = vsyncadd [#allocation9], %s929
      %s932 = sshll.u32 [#allocation12], 4
      %s933 = int_to_ptr.vmem [resolvable:$true] %s932
      %935 = dma.vmem_to_hbm [thread:$0]  %s933, 128, %s7, [#allocation9]
    $region37: #{torch_model_forward.1} parent=1 // pred_fallthru
      _
    // Predicated region
    $region38: #{torch_model_forward.1} parent=1 // pred_check
      _
    $region39: #{torch_model_forward.1} parent=1 // pred_check_branch
      %937 = sbr.rel (0) target = $region41
    $region40: #{torch_model_forward.1} parent=1 // pred_region
      %938 = dma.done [#allocation9], 128
    $region41: #{torch_model_forward.1} parent=1 // pred_fallthru
      _
    %939 = vsyncpa [#allocation8], 1
    %940 = vsyncpa [#allocation11], 1
    %941 = vsyncpa [#allocation9], 1

</llo_original>
